<compile_context>
chip_gen: v7x
topology: tpu7x:2x2x1
jax: 0.10.0
libtpu: 0.0.40
codegen_flags: <defaults>
</compile_context>

<pallas_src>
import functools

import jax
import jax.numpy as jnp
from jax import lax
from jax.experimental import pallas as pl
from jax.experimental.pallas import tpu as pltpu


def _sepconv_kernel(x_ref, dw_ref, pw_ref, out_ref, *, cin, mult, k, ho, wo):
    """Fused depthwise + pointwise conv for one batch element.

    x_ref  : (1, Cin, H, W)   VMEM input block (NCHW, W on the lane axis)
    dw_ref : (Cmid, k*k)      SMEM depthwise weights (scalar reads)
    pw_ref : (Cout, Cmid)     SMEM pointwise (1x1) weights (scalar reads)
    out_ref: (1, Cout, Ho, Wo)
    """
    cout = out_ref.shape[1]

    # Pointwise accumulators: one (Ho, Wo) f32 tile per output channel.
    out_acc = [jnp.zeros((ho, wo), jnp.float32) for _ in range(cout)]

    for ci in range(cin):
        # Depthwise accumulators for the `mult` mid-channels fed by input channel
        # ci (PyTorch grouped-conv ordering: mid channel cm = ci * mult + m).
        mid_acc = [jnp.zeros((ho, wo), jnp.float32) for _ in range(mult)]
        for kh in range(k):
            for kw in range(k):
                # (Ho, Wo) tap window read directly from the resident VMEM block
                # (static offsets -> a plain shifted load, no full-tile copies).
                win = x_ref[0, ci, pl.ds(kh, ho), pl.ds(kw, wo)].astype(jnp.float32)
                for m in range(mult):
                    w = dw_ref[ci * mult + m, kh * k + kw]   # SMEM scalar
                    mid_acc[m] = mid_acc[m] + w * win
        # Pointwise (1x1) conv: fold finished mid-channels into the output
        # accumulators as VPU broadcast-MACs (no tiny-K/N MXU matmul).
        for m in range(mult):
            cm = ci * mult + m
            for co in range(cout):
                out_acc[co] = out_acc[co] + pw_ref[co, cm] * mid_acc[m]

    for co in range(cout):
        out_ref[0, co, :, :] = out_acc[co].astype(out_ref.dtype)


def separable_conv2d(x_nchw, dw_weight, pw_weight, in_channels):
    """x_nchw   : (N, Cin, H, W)
    dw_weight: (Cmid, 1, k, k)   PyTorch depthwise layout (groups=Cin)
    pw_weight: (Cout, Cmid, 1, 1)
    returns  : (N, Cout, Ho, Wo) with Ho = H - k + 1, Wo = W - k + 1 (stride 1, VALID)
    """
    N, Cin, H, W = x_nchw.shape
    Cmid, _, k, _ = dw_weight.shape
    Cout = pw_weight.shape[0]
    mult = Cmid // Cin
    Ho, Wo = H - k + 1, W - k + 1

    # Small weight tables, flattened so SMEM padding stays tiny.
    dw = dw_weight[:, 0].reshape(Cmid, k * k).astype(jnp.float32)   # (Cmid, k*k)
    pw = pw_weight[:, :, 0, 0].astype(jnp.float32)                  # (Cout, Cmid)

    kernel = functools.partial(
        _sepconv_kernel, cin=Cin, mult=mult, k=k, ho=Ho, wo=Wo)

    # TODO(synk): for large images, add an Ho-tile grid axis (with k-1 halo rows
    # via manual DMA) to cap the VMEM block for v7x's 64 MiB and to feed both v7x
    # TensorCores even when N is small/odd.
    return pl.pallas_call(
        kernel,
        out_shape=jax.ShapeDtypeStruct((N, Cout, Ho, Wo), x_nchw.dtype),
        grid=(N,),
        in_specs=[
            pl.BlockSpec((1, Cin, H, W), lambda n: (n, 0, 0, 0)),
            pl.BlockSpec(memory_space=pltpu.MemorySpace.SMEM),
            pl.BlockSpec(memory_space=pltpu.MemorySpace.SMEM),
        ],
        out_specs=pl.BlockSpec((1, Cout, Ho, Wo), lambda n: (n, 0, 0, 0)),
        compiler_params=pltpu.CompilerParams(
            dimension_semantics=("parallel",),
            vmem_limit_bytes=32 * 1024 * 1024,
        ),
    )(x_nchw, dw, pw)


def _reference(x_nchw, dw_weight, pw_weight, in_channels):
    """Pure-JAX reference matching nn.Conv2d semantics (stride 1, no padding)."""
    dn = lax.conv_dimension_numbers(x_nchw.shape, dw_weight.shape,
                                    ("NCHW", "OIHW", "NCHW"))
    mid = lax.conv_general_dilated(x_nchw, dw_weight, (1, 1), "VALID",
                                   dimension_numbers=dn,
                                   feature_group_count=in_channels)
    dn2 = lax.conv_dimension_numbers(mid.shape, pw_weight.shape,
                                     ("NCHW", "OIHW", "NCHW"))
    return lax.conv_general_dilated(mid, pw_weight, (1, 1), "VALID",
                                    dimension_numbers=dn2)


if __name__ == "__main__":
    # Small, deterministic config consistent with the module:
    #   in_channels=4, out_channels=4, depth=2, kernel_size=3, bias=False
    N, Cin, H, W = 2, 4, 16, 16
    out_channels, depth, k = 4, 2, 3
    Cmid = out_channels * depth            # 8 (divisible by Cin, as grouped conv requires)
    Cout = out_channels

    key = jax.random.PRNGKey(0)
    kx, kdw, kpw = jax.random.split(key, 3)
    x = jax.random.normal(kx, (N, Cin, H, W), dtype=jnp.float32)
    dw_weight = jax.random.normal(kdw, (Cmid, 1, k, k), dtype=jnp.float32) * 0.1
    pw_weight = jax.random.normal(kpw, (Cout, Cmid, 1, 1), dtype=jnp.float32) * 0.1

    out = separable_conv2d(x, dw_weight, pw_weight, Cin)
    out = jax.block_until_ready(out)

    ref = _reference(x, dw_weight, pw_weight, Cin)
    assert out.shape == ref.shape == (N, Cout, H - k + 1, W - k + 1)
    assert jnp.allclose(out, ref, atol=1e-4, rtol=1e-4)

    print("KERNEL_OK")
</pallas_src>

<mosaic_0001>
module attributes {stable_mosaic.version = 11 : i64} {
  func.func @_sepconv_kernel(%arg0: i32, %arg1: memref<1x4x16x16xf32, #tpu.memory_space<vmem>>, %arg2: memref<8x9xf32, #tpu.memory_space<smem>>, %arg3: memref<4x8xf32, #tpu.memory_space<smem>>, %arg4: memref<1x4x14x14xf32, #tpu.memory_space<vmem>>) attributes {dimension_semantics = [#tpu.dimension_semantics<parallel>], iteration_bounds = array<i64: 2>, scalar_prefetch = 0 : i64, scratch_operands = 0 : i64, tpu.core_type = #tpu.core_type<tc>, window_params = [{transform_indices = @transform_0, window_bounds = array<i64: 1, 4, 16, 16>}, {transform_indices = @transform_1, window_bounds = array<i64: 8, 9>}, {transform_indices = @transform_2, window_bounds = array<i64: 4, 8>}, {transform_indices = @transform_3, window_bounds = array<i64: 1, 4, 14, 14>}]} {
    %cst = arith.constant 0.000000e+00 : f32
    %0 = vector.broadcast %cst : f32 to vector<14x14xf32>
    %cst_0 = arith.constant 0.000000e+00 : f32
    %1 = vector.broadcast %cst_0 : f32 to vector<14x14xf32>
    %cst_1 = arith.constant 0.000000e+00 : f32
    %2 = vector.broadcast %cst_1 : f32 to vector<14x14xf32>
    %cst_2 = arith.constant 0.000000e+00 : f32
    %3 = vector.broadcast %cst_2 : f32 to vector<14x14xf32>
    %cst_3 = arith.constant 0.000000e+00 : f32
    %4 = vector.broadcast %cst_3 : f32 to vector<14x14xf32>
    %cst_4 = arith.constant 0.000000e+00 : f32
    %5 = vector.broadcast %cst_4 : f32 to vector<14x14xf32>
    %c0 = arith.constant 0 : index
    %c0_5 = arith.constant 0 : index
    %c0_6 = arith.constant 0 : index
    %c0_7 = arith.constant 0 : index
    %6 = vector.load %arg1[%c0, %c0_5, %c0_6, %c0_7] : memref<1x4x16x16xf32, #tpu.memory_space<vmem>>, vector<1x1x14x14xf32>
    %7 = vector.shape_cast %6 : vector<1x1x14x14xf32> to vector<14x14xf32>
    %c0_8 = arith.constant 0 : index
    %c0_9 = arith.constant 0 : index
    %8 = memref.load %arg2[%c0_8, %c0_9] : memref<8x9xf32, #tpu.memory_space<smem>>
    %9 = vector.broadcast %8 : f32 to vector<14x14xf32>
    %10 = arith.mulf %9, %7 : vector<14x14xf32>
    %11 = arith.addf %4, %10 : vector<14x14xf32>
    %c1 = arith.constant 1 : index
    %c0_10 = arith.constant 0 : index
    %12 = memref.load %arg2[%c1, %c0_10] : memref<8x9xf32, #tpu.memory_space<smem>>
    %13 = vector.broadcast %12 : f32 to vector<14x14xf32>
    %14 = arith.mulf %13, %7 : vector<14x14xf32>
    %15 = arith.addf %5, %14 : vector<14x14xf32>
    %c0_11 = arith.constant 0 : index
    %c0_12 = arith.constant 0 : index
    %c0_13 = arith.constant 0 : index
    %c1_14 = arith.constant 1 : index
    %16 = vector.load %arg1[%c0_11, %c0_12, %c0_13, %c1_14] : memref<1x4x16x16xf32, #tpu.memory_space<vmem>>, vector<1x1x14x14xf32>
    %17 = vector.shape_cast %16 : vector<1x1x14x14xf32> to vector<14x14xf32>
    %c0_15 = arith.constant 0 : index
    %c1_16 = arith.constant 1 : index
    %18 = memref.load %arg2[%c0_15, %c1_16] : memref<8x9xf32, #tpu.memory_space<smem>>
    %19 = vector.broadcast %18 : f32 to vector<14x14xf32>
    %20 = arith.mulf %19, %17 : vector<14x14xf32>
    %21 = arith.addf %11, %20 : vector<14x14xf32>
    %c1_17 = arith.constant 1 : index
    %c1_18 = arith.constant 1 : index
    %22 = memref.load %arg2[%c1_17, %c1_18] : memref<8x9xf32, #tpu.memory_space<smem>>
    %23 = vector.broadcast %22 : f32 to vector<14x14xf32>
    %24 = arith.mulf %23, %17 : vector<14x14xf32>
    %25 = arith.addf %15, %24 : vector<14x14xf32>
    %c0_19 = arith.constant 0 : index
    %c0_20 = arith.constant 0 : index
    %c0_21 = arith.constant 0 : index
    %c2 = arith.constant 2 : index
    %26 = vector.load %arg1[%c0_19, %c0_20, %c0_21, %c2] : memref<1x4x16x16xf32, #tpu.memory_space<vmem>>, vector<1x1x14x14xf32>
    %27 = vector.shape_cast %26 : vector<1x1x14x14xf32> to vector<14x14xf32>
    %c0_22 = arith.constant 0 : index
    %c2_23 = arith.constant 2 : index
    %28 = memref.load %arg2[%c0_22, %c2_23] : memref<8x9xf32, #tpu.memory_space<smem>>
    %29 = vector.broadcast %28 : f32 to vector<14x14xf32>
    %30 = arith.mulf %29, %27 : vector<14x14xf32>
    %31 = arith.addf %21, %30 : vector<14x14xf32>
    %c1_24 = arith.constant 1 : index
    %c2_25 = arith.constant 2 : index
    %32 = memref.load %arg2[%c1_24, %c2_25] : memref<8x9xf32, #tpu.memory_space<smem>>
    %33 = vector.broadcast %32 : f32 to vector<14x14xf32>
    %34 = arith.mulf %33, %27 : vector<14x14xf32>
    %35 = arith.addf %25, %34 : vector<14x14xf32>
    %c0_26 = arith.constant 0 : index
    %c0_27 = arith.constant 0 : index
    %c1_28 = arith.constant 1 : index
    %c0_29 = arith.constant 0 : index
    %36 = vector.load %arg1[%c0_26, %c0_27, %c1_28, %c0_29] : memref<1x4x16x16xf32, #tpu.memory_space<vmem>>, vector<1x1x14x14xf32>
    %37 = vector.shape_cast %36 : vector<1x1x14x14xf32> to vector<14x14xf32>
    %c0_30 = arith.constant 0 : index
    %c3 = arith.constant 3 : index
    %38 = memref.load %arg2[%c0_30, %c3] : memref<8x9xf32, #tpu.memory_space<smem>>
    %39 = vector.broadcast %38 : f32 to vector<14x14xf32>
    %40 = arith.mulf %39, %37 : vector<14x14xf32>
    %41 = arith.addf %31, %40 : vector<14x14xf32>
    %c1_31 = arith.constant 1 : index
    %c3_32 = arith.constant 3 : index
    %42 = memref.load %arg2[%c1_31, %c3_32] : memref<8x9xf32, #tpu.memory_space<smem>>
    %43 = vector.broadcast %42 : f32 to vector<14x14xf32>
    %44 = arith.mulf %43, %37 : vector<14x14xf32>
    %45 = arith.addf %35, %44 : vector<14x14xf32>
    %c0_33 = arith.constant 0 : index
    %c0_34 = arith.constant 0 : index
    %c1_35 = arith.constant 1 : index
    %c1_36 = arith.constant 1 : index
    %46 = vector.load %arg1[%c0_33, %c0_34, %c1_35, %c1_36] : memref<1x4x16x16xf32, #tpu.memory_space<vmem>>, vector<1x1x14x14xf32>
    %47 = vector.shape_cast %46 : vector<1x1x14x14xf32> to vector<14x14xf32>
    %c0_37 = arith.constant 0 : index
    %c4 = arith.constant 4 : index
    %48 = memref.load %arg2[%c0_37, %c4] : memref<8x9xf32, #tpu.memory_space<smem>>
    %49 = vector.broadcast %48 : f32 to vector<14x14xf32>
    %50 = arith.mulf %49, %47 : vector<14x14xf32>
    %51 = arith.addf %41, %50 : vector<14x14xf32>
    %c1_38 = arith.constant 1 : index
    %c4_39 = arith.constant 4 : index
    %52 = memref.load %arg2[%c1_38, %c4_39] : memref<8x9xf32, #tpu.memory_space<smem>>
    %53 = vector.broadcast %52 : f32 to vector<14x14xf32>
    %54 = arith.mulf %53, %47 : vector<14x14xf32>
    %55 = arith.addf %45, %54 : vector<14x14xf32>
    %c0_40 = arith.constant 0 : index
    %c0_41 = arith.constant 0 : index
    %c1_42 = arith.constant 1 : index
    %c2_43 = arith.constant 2 : index
    %56 = vector.load %arg1[%c0_40, %c0_41, %c1_42, %c2_43] : memref<1x4x16x16xf32, #tpu.memory_space<vmem>>, vector<1x1x14x14xf32>
    %57 = vector.shape_cast %56 : vector<1x1x14x14xf32> to vector<14x14xf32>
    %c0_44 = arith.constant 0 : index
    %c5 = arith.constant 5 : index
    %58 = memref.load %arg2[%c0_44, %c5] : memref<8x9xf32, #tpu.memory_space<smem>>
    %59 = vector.broadcast %58 : f32 to vector<14x14xf32>
    %60 = arith.mulf %59, %57 : vector<14x14xf32>
    %61 = arith.addf %51, %60 : vector<14x14xf32>
    %c1_45 = arith.constant 1 : index
    %c5_46 = arith.constant 5 : index
    %62 = memref.load %arg2[%c1_45, %c5_46] : memref<8x9xf32, #tpu.memory_space<smem>>
    %63 = vector.broadcast %62 : f32 to vector<14x14xf32>
    %64 = arith.mulf %63, %57 : vector<14x14xf32>
    %65 = arith.addf %55, %64 : vector<14x14xf32>
    %c0_47 = arith.constant 0 : index
    %c0_48 = arith.constant 0 : index
    %c2_49 = arith.constant 2 : index
    %c0_50 = arith.constant 0 : index
    %66 = vector.load %arg1[%c0_47, %c0_48, %c2_49, %c0_50] : memref<1x4x16x16xf32, #tpu.memory_space<vmem>>, vector<1x1x14x14xf32>
    %67 = vector.shape_cast %66 : vector<1x1x14x14xf32> to vector<14x14xf32>
    %c0_51 = arith.constant 0 : index
    %c6 = arith.constant 6 : index
    %68 = memref.load %arg2[%c0_51, %c6] : memref<8x9xf32, #tpu.memory_space<smem>>
    %69 = vector.broadcast %68 : f32 to vector<14x14xf32>
    %70 = arith.mulf %69, %67 : vector<14x14xf32>
    %71 = arith.addf %61, %70 : vector<14x14xf32>
    %c1_52 = arith.constant 1 : index
    %c6_53 = arith.constant 6 : index
    %72 = memref.load %arg2[%c1_52, %c6_53] : memref<8x9xf32, #tpu.memory_space<smem>>
    %73 = vector.broadcast %72 : f32 to vector<14x14xf32>
    %74 = arith.mulf %73, %67 : vector<14x14xf32>
    %75 = arith.addf %65, %74 : vector<14x14xf32>
    %c0_54 = arith.constant 0 : index
    %c0_55 = arith.constant 0 : index
    %c2_56 = arith.constant 2 : index
    %c1_57 = arith.constant 1 : index
    %76 = vector.load %arg1[%c0_54, %c0_55, %c2_56, %c1_57] : memref<1x4x16x16xf32, #tpu.memory_space<vmem>>, vector<1x1x14x14xf32>
    %77 = vector.shape_cast %76 : vector<1x1x14x14xf32> to vector<14x14xf32>
    %c0_58 = arith.constant 0 : index
    %c7 = arith.constant 7 : index
    %78 = memref.load %arg2[%c0_58, %c7] : memref<8x9xf32, #tpu.memory_space<smem>>
    %79 = vector.broadcast %78 : f32 to vector<14x14xf32>
    %80 = arith.mulf %79, %77 : vector<14x14xf32>
    %81 = arith.addf %71, %80 : vector<14x14xf32>
    %c1_59 = arith.constant 1 : index
    %c7_60 = arith.constant 7 : index
    %82 = memref.load %arg2[%c1_59, %c7_60] : memref<8x9xf32, #tpu.memory_space<smem>>
    %83 = vector.broadcast %82 : f32 to vector<14x14xf32>
    %84 = arith.mulf %83, %77 : vector<14x14xf32>
    %85 = arith.addf %75, %84 : vector<14x14xf32>
    %c0_61 = arith.constant 0 : index
    %c0_62 = arith.constant 0 : index
    %c2_63 = arith.constant 2 : index
    %c2_64 = arith.constant 2 : index
    %86 = vector.load %arg1[%c0_61, %c0_62, %c2_63, %c2_64] : memref<1x4x16x16xf32, #tpu.memory_space<vmem>>, vector<1x1x14x14xf32>
    %87 = vector.shape_cast %86 : vector<1x1x14x14xf32> to vector<14x14xf32>
    %c0_65 = arith.constant 0 : index
    %c8 = arith.constant 8 : index
    %88 = memref.load %arg2[%c0_65, %c8] : memref<8x9xf32, #tpu.memory_space<smem>>
    %89 = vector.broadcast %88 : f32 to vector<14x14xf32>
    %90 = arith.mulf %89, %87 : vector<14x14xf32>
    %91 = arith.addf %81, %90 : vector<14x14xf32>
    %c1_66 = arith.constant 1 : index
    %c8_67 = arith.constant 8 : index
    %92 = memref.load %arg2[%c1_66, %c8_67] : memref<8x9xf32, #tpu.memory_space<smem>>
    %93 = vector.broadcast %92 : f32 to vector<14x14xf32>
    %94 = arith.mulf %93, %87 : vector<14x14xf32>
    %95 = arith.addf %85, %94 : vector<14x14xf32>
    %c0_68 = arith.constant 0 : index
    %c0_69 = arith.constant 0 : index
    %96 = memref.load %arg3[%c0_68, %c0_69] : memref<4x8xf32, #tpu.memory_space<smem>>
    %97 = vector.broadcast %96 : f32 to vector<14x14xf32>
    %98 = arith.mulf %97, %91 : vector<14x14xf32>
    %99 = arith.addf %0, %98 : vector<14x14xf32>
    %c1_70 = arith.constant 1 : index
    %c0_71 = arith.constant 0 : index
    %100 = memref.load %arg3[%c1_70, %c0_71] : memref<4x8xf32, #tpu.memory_space<smem>>
    %101 = vector.broadcast %100 : f32 to vector<14x14xf32>
    %102 = arith.mulf %101, %91 : vector<14x14xf32>
    %103 = arith.addf %1, %102 : vector<14x14xf32>
    %c2_72 = arith.constant 2 : index
    %c0_73 = arith.constant 0 : index
    %104 = memref.load %arg3[%c2_72, %c0_73] : memref<4x8xf32, #tpu.memory_space<smem>>
    %105 = vector.broadcast %104 : f32 to vector<14x14xf32>
    %106 = arith.mulf %105, %91 : vector<14x14xf32>
    %107 = arith.addf %2, %106 : vector<14x14xf32>
    %c3_74 = arith.constant 3 : index
    %c0_75 = arith.constant 0 : index
    %108 = memref.load %arg3[%c3_74, %c0_75] : memref<4x8xf32, #tpu.memory_space<smem>>
    %109 = vector.broadcast %108 : f32 to vector<14x14xf32>
    %110 = arith.mulf %109, %91 : vector<14x14xf32>
    %111 = arith.addf %3, %110 : vector<14x14xf32>
    %c0_76 = arith.constant 0 : index
    %c1_77 = arith.constant 1 : index
    %112 = memref.load %arg3[%c0_76, %c1_77] : memref<4x8xf32, #tpu.memory_space<smem>>
    %113 = vector.broadcast %112 : f32 to vector<14x14xf32>
    %114 = arith.mulf %113, %95 : vector<14x14xf32>
    %115 = arith.addf %99, %114 : vector<14x14xf32>
    %c1_78 = arith.constant 1 : index
    %c1_79 = arith.constant 1 : index
    %116 = memref.load %arg3[%c1_78, %c1_79] : memref<4x8xf32, #tpu.memory_space<smem>>
    %117 = vector.broadcast %116 : f32 to vector<14x14xf32>
    %118 = arith.mulf %117, %95 : vector<14x14xf32>
    %119 = arith.addf %103, %118 : vector<14x14xf32>
    %c2_80 = arith.constant 2 : index
    %c1_81 = arith.constant 1 : index
    %120 = memref.load %arg3[%c2_80, %c1_81] : memref<4x8xf32, #tpu.memory_space<smem>>
    %121 = vector.broadcast %120 : f32 to vector<14x14xf32>
    %122 = arith.mulf %121, %95 : vector<14x14xf32>
    %123 = arith.addf %107, %122 : vector<14x14xf32>
    %c3_82 = arith.constant 3 : index
    %c1_83 = arith.constant 1 : index
    %124 = memref.load %arg3[%c3_82, %c1_83] : memref<4x8xf32, #tpu.memory_space<smem>>
    %125 = vector.broadcast %124 : f32 to vector<14x14xf32>
    %126 = arith.mulf %125, %95 : vector<14x14xf32>
    %127 = arith.addf %111, %126 : vector<14x14xf32>
    %cst_84 = arith.constant 0.000000e+00 : f32
    %128 = vector.broadcast %cst_84 : f32 to vector<14x14xf32>
    %cst_85 = arith.constant 0.000000e+00 : f32
    %129 = vector.broadcast %cst_85 : f32 to vector<14x14xf32>
    %c0_86 = arith.constant 0 : index
    %c1_87 = arith.constant 1 : index
    %c0_88 = arith.constant 0 : index
    %c0_89 = arith.constant 0 : index
    %130 = vector.load %arg1[%c0_86, %c1_87, %c0_88, %c0_89] : memref<1x4x16x16xf32, #tpu.memory_space<vmem>>, vector<1x1x14x14xf32>
    %131 = vector.shape_cast %130 : vector<1x1x14x14xf32> to vector<14x14xf32>
    %c2_90 = arith.constant 2 : index
    %c0_91 = arith.constant 0 : index
    %132 = memref.load %arg2[%c2_90, %c0_91] : memref<8x9xf32, #tpu.memory_space<smem>>
    %133 = vector.broadcast %132 : f32 to vector<14x14xf32>
    %134 = arith.mulf %133, %131 : vector<14x14xf32>
    %135 = arith.addf %128, %134 : vector<14x14xf32>
    %c3_92 = arith.constant 3 : index
    %c0_93 = arith.constant 0 : index
    %136 = memref.load %arg2[%c3_92, %c0_93] : memref<8x9xf32, #tpu.memory_space<smem>>
    %137 = vector.broadcast %136 : f32 to vector<14x14xf32>
    %138 = arith.mulf %137, %131 : vector<14x14xf32>
    %139 = arith.addf %129, %138 : vector<14x14xf32>
    %c0_94 = arith.constant 0 : index
    %c1_95 = arith.constant 1 : index
    %c0_96 = arith.constant 0 : index
    %c1_97 = arith.constant 1 : index
    %140 = vector.load %arg1[%c0_94, %c1_95, %c0_96, %c1_97] : memref<1x4x16x16xf32, #tpu.memory_space<vmem>>, vector<1x1x14x14xf32>
    %141 = vector.shape_cast %140 : vector<1x1x14x14xf32> to vector<14x14xf32>
    %c2_98 = arith.constant 2 : index
    %c1_99 = arith.constant 1 : index
    %142 = memref.load %arg2[%c2_98, %c1_99] : memref<8x9xf32, #tpu.memory_space<smem>>
    %143 = vector.broadcast %142 : f32 to vector<14x14xf32>
    %144 = arith.mulf %143, %141 : vector<14x14xf32>
    %145 = arith.addf %135, %144 : vector<14x14xf32>
    %c3_100 = arith.constant 3 : index
    %c1_101 = arith.constant 1 : index
    %146 = memref.load %arg2[%c3_100, %c1_101] : memref<8x9xf32, #tpu.memory_space<smem>>
    %147 = vector.broadcast %146 : f32 to vector<14x14xf32>
    %148 = arith.mulf %147, %141 : vector<14x14xf32>
    %149 = arith.addf %139, %148 : vector<14x14xf32>
    %c0_102 = arith.constant 0 : index
    %c1_103 = arith.constant 1 : index
    %c0_104 = arith.constant 0 : index
    %c2_105 = arith.constant 2 : index
    %150 = vector.load %arg1[%c0_102, %c1_103, %c0_104, %c2_105] : memref<1x4x16x16xf32, #tpu.memory_space<vmem>>, vector<1x1x14x14xf32>
    %151 = vector.shape_cast %150 : vector<1x1x14x14xf32> to vector<14x14xf32>
    %c2_106 = arith.constant 2 : index
    %c2_107 = arith.constant 2 : index
    %152 = memref.load %arg2[%c2_106, %c2_107] : memref<8x9xf32, #tpu.memory_space<smem>>
    %153 = vector.broadcast %152 : f32 to vector<14x14xf32>
    %154 = arith.mulf %153, %151 : vector<14x14xf32>
    %155 = arith.addf %145, %154 : vector<14x14xf32>
    %c3_108 = arith.constant 3 : index
    %c2_109 = arith.constant 2 : index
    %156 = memref.load %arg2[%c3_108, %c2_109] : memref<8x9xf32, #tpu.memory_space<smem>>
    %157 = vector.broadcast %156 : f32 to vector<14x14xf32>
    %158 = arith.mulf %157, %151 : vector<14x14xf32>
    %159 = arith.addf %149, %158 : vector<14x14xf32>
    %c0_110 = arith.constant 0 : index
    %c1_111 = arith.constant 1 : index
    %c1_112 = arith.constant 1 : index
    %c0_113 = arith.constant 0 : index
    %160 = vector.load %arg1[%c0_110, %c1_111, %c1_112, %c0_113] : memref<1x4x16x16xf32, #tpu.memory_space<vmem>>, vector<1x1x14x14xf32>
    %161 = vector.shape_cast %160 : vector<1x1x14x14xf32> to vector<14x14xf32>
    %c2_114 = arith.constant 2 : index
    %c3_115 = arith.constant 3 : index
    %162 = memref.load %arg2[%c2_114, %c3_115] : memref<8x9xf32, #tpu.memory_space<smem>>
    %163 = vector.broadcast %162 : f32 to vector<14x14xf32>
    %164 = arith.mulf %163, %161 : vector<14x14xf32>
    %165 = arith.addf %155, %164 : vector<14x14xf32>
    %c3_116 = arith.constant 3 : index
    %c3_117 = arith.constant 3 : index
    %166 = memref.load %arg2[%c3_116, %c3_117] : memref<8x9xf32, #tpu.memory_space<smem>>
    %167 = vector.broadcast %166 : f32 to vector<14x14xf32>
    %168 = arith.mulf %167, %161 : vector<14x14xf32>
    %169 = arith.addf %159, %168 : vector<14x14xf32>
    %c0_118 = arith.constant 0 : index
    %c1_119 = arith.constant 1 : index
    %c1_120 = arith.constant 1 : index
    %c1_121 = arith.constant 1 : index
    %170 = vector.load %arg1[%c0_118, %c1_119, %c1_120, %c1_121] : memref<1x4x16x16xf32, #tpu.memory_space<vmem>>, vector<1x1x14x14xf32>
    %171 = vector.shape_cast %170 : vector<1x1x14x14xf32> to vector<14x14xf32>
    %c2_122 = arith.constant 2 : index
    %c4_123 = arith.constant 4 : index
    %172 = memref.load %arg2[%c2_122, %c4_123] : memref<8x9xf32, #tpu.memory_space<smem>>
    %173 = vector.broadcast %172 : f32 to vector<14x14xf32>
    %174 = arith.mulf %173, %171 : vector<14x14xf32>
    %175 = arith.addf %165, %174 : vector<14x14xf32>
    %c3_124 = arith.constant 3 : index
    %c4_125 = arith.constant 4 : index
    %176 = memref.load %arg2[%c3_124, %c4_125] : memref<8x9xf32, #tpu.memory_space<smem>>
    %177 = vector.broadcast %176 : f32 to vector<14x14xf32>
    %178 = arith.mulf %177, %171 : vector<14x14xf32>
    %179 = arith.addf %169, %178 : vector<14x14xf32>
    %c0_126 = arith.constant 0 : index
    %c1_127 = arith.constant 1 : index
    %c1_128 = arith.constant 1 : index
    %c2_129 = arith.constant 2 : index
    %180 = vector.load %arg1[%c0_126, %c1_127, %c1_128, %c2_129] : memref<1x4x16x16xf32, #tpu.memory_space<vmem>>, vector<1x1x14x14xf32>
    %181 = vector.shape_cast %180 : vector<1x1x14x14xf32> to vector<14x14xf32>
    %c2_130 = arith.constant 2 : index
    %c5_131 = arith.constant 5 : index
    %182 = memref.load %arg2[%c2_130, %c5_131] : memref<8x9xf32, #tpu.memory_space<smem>>
    %183 = vector.broadcast %182 : f32 to vector<14x14xf32>
    %184 = arith.mulf %183, %181 : vector<14x14xf32>
    %185 = arith.addf %175, %184 : vector<14x14xf32>
    %c3_132 = arith.constant 3 : index
    %c5_133 = arith.constant 5 : index
    %186 = memref.load %arg2[%c3_132, %c5_133] : memref<8x9xf32, #tpu.memory_space<smem>>
    %187 = vector.broadcast %186 : f32 to vector<14x14xf32>
    %188 = arith.mulf %187, %181 : vector<14x14xf32>
    %189 = arith.addf %179, %188 : vector<14x14xf32>
    %c0_134 = arith.constant 0 : index
    %c1_135 = arith.constant 1 : index
    %c2_136 = arith.constant 2 : index
    %c0_137 = arith.constant 0 : index
    %190 = vector.load %arg1[%c0_134, %c1_135, %c2_136, %c0_137] : memref<1x4x16x16xf32, #tpu.memory_space<vmem>>, vector<1x1x14x14xf32>
    %191 = vector.shape_cast %190 : vector<1x1x14x14xf32> to vector<14x14xf32>
    %c2_138 = arith.constant 2 : index
    %c6_139 = arith.constant 6 : index
    %192 = memref.load %arg2[%c2_138, %c6_139] : memref<8x9xf32, #tpu.memory_space<smem>>
    %193 = vector.broadcast %192 : f32 to vector<14x14xf32>
    %194 = arith.mulf %193, %191 : vector<14x14xf32>
    %195 = arith.addf %185, %194 : vector<14x14xf32>
    %c3_140 = arith.constant 3 : index
    %c6_141 = arith.constant 6 : index
    %196 = memref.load %arg2[%c3_140, %c6_141] : memref<8x9xf32, #tpu.memory_space<smem>>
    %197 = vector.broadcast %196 : f32 to vector<14x14xf32>
    %198 = arith.mulf %197, %191 : vector<14x14xf32>
    %199 = arith.addf %189, %198 : vector<14x14xf32>
    %c0_142 = arith.constant 0 : index
    %c1_143 = arith.constant 1 : index
    %c2_144 = arith.constant 2 : index
    %c1_145 = arith.constant 1 : index
    %200 = vector.load %arg1[%c0_142, %c1_143, %c2_144, %c1_145] : memref<1x4x16x16xf32, #tpu.memory_space<vmem>>, vector<1x1x14x14xf32>
    %201 = vector.shape_cast %200 : vector<1x1x14x14xf32> to vector<14x14xf32>
    %c2_146 = arith.constant 2 : index
    %c7_147 = arith.constant 7 : index
    %202 = memref.load %arg2[%c2_146, %c7_147] : memref<8x9xf32, #tpu.memory_space<smem>>
    %203 = vector.broadcast %202 : f32 to vector<14x14xf32>
    %204 = arith.mulf %203, %201 : vector<14x14xf32>
    %205 = arith.addf %195, %204 : vector<14x14xf32>
    %c3_148 = arith.constant 3 : index
    %c7_149 = arith.constant 7 : index
    %206 = memref.load %arg2[%c3_148, %c7_149] : memref<8x9xf32, #tpu.memory_space<smem>>
    %207 = vector.broadcast %206 : f32 to vector<14x14xf32>
    %208 = arith.mulf %207, %201 : vector<14x14xf32>
    %209 = arith.addf %199, %208 : vector<14x14xf32>
    %c0_150 = arith.constant 0 : index
    %c1_151 = arith.constant 1 : index
    %c2_152 = arith.constant 2 : index
    %c2_153 = arith.constant 2 : index
    %210 = vector.load %arg1[%c0_150, %c1_151, %c2_152, %c2_153] : memref<1x4x16x16xf32, #tpu.memory_space<vmem>>, vector<1x1x14x14xf32>
    %211 = vector.shape_cast %210 : vector<1x1x14x14xf32> to vector<14x14xf32>
    %c2_154 = arith.constant 2 : index
    %c8_155 = arith.constant 8 : index
    %212 = memref.load %arg2[%c2_154, %c8_155] : memref<8x9xf32, #tpu.memory_space<smem>>
    %213 = vector.broadcast %212 : f32 to vector<14x14xf32>
    %214 = arith.mulf %213, %211 : vector<14x14xf32>
    %215 = arith.addf %205, %214 : vector<14x14xf32>
    %c3_156 = arith.constant 3 : index
    %c8_157 = arith.constant 8 : index
    %216 = memref.load %arg2[%c3_156, %c8_157] : memref<8x9xf32, #tpu.memory_space<smem>>
    %217 = vector.broadcast %216 : f32 to vector<14x14xf32>
    %218 = arith.mulf %217, %211 : vector<14x14xf32>
    %219 = arith.addf %209, %218 : vector<14x14xf32>
    %c0_158 = arith.constant 0 : index
    %c2_159 = arith.constant 2 : index
    %220 = memref.load %arg3[%c0_158, %c2_159] : memref<4x8xf32, #tpu.memory_space<smem>>
    %221 = vector.broadcast %220 : f32 to vector<14x14xf32>
    %222 = arith.mulf %221, %215 : vector<14x14xf32>
    %223 = arith.addf %115, %222 : vector<14x14xf32>
    %c1_160 = arith.constant 1 : index
    %c2_161 = arith.constant 2 : index
    %224 = memref.load %arg3[%c1_160, %c2_161] : memref<4x8xf32, #tpu.memory_space<smem>>
    %225 = vector.broadcast %224 : f32 to vector<14x14xf32>
    %226 = arith.mulf %225, %215 : vector<14x14xf32>
    %227 = arith.addf %119, %226 : vector<14x14xf32>
    %c2_162 = arith.constant 2 : index
    %c2_163 = arith.constant 2 : index
    %228 = memref.load %arg3[%c2_162, %c2_163] : memref<4x8xf32, #tpu.memory_space<smem>>
    %229 = vector.broadcast %228 : f32 to vector<14x14xf32>
    %230 = arith.mulf %229, %215 : vector<14x14xf32>
    %231 = arith.addf %123, %230 : vector<14x14xf32>
    %c3_164 = arith.constant 3 : index
    %c2_165 = arith.constant 2 : index
    %232 = memref.load %arg3[%c3_164, %c2_165] : memref<4x8xf32, #tpu.memory_space<smem>>
    %233 = vector.broadcast %232 : f32 to vector<14x14xf32>
    %234 = arith.mulf %233, %215 : vector<14x14xf32>
    %235 = arith.addf %127, %234 : vector<14x14xf32>
    %c0_166 = arith.constant 0 : index
    %c3_167 = arith.constant 3 : index
    %236 = memref.load %arg3[%c0_166, %c3_167] : memref<4x8xf32, #tpu.memory_space<smem>>
    %237 = vector.broadcast %236 : f32 to vector<14x14xf32>
    %238 = arith.mulf %237, %219 : vector<14x14xf32>
    %239 = arith.addf %223, %238 : vector<14x14xf32>
    %c1_168 = arith.constant 1 : index
    %c3_169 = arith.constant 3 : index
    %240 = memref.load %arg3[%c1_168, %c3_169] : memref<4x8xf32, #tpu.memory_space<smem>>
    %241 = vector.broadcast %240 : f32 to vector<14x14xf32>
    %242 = arith.mulf %241, %219 : vector<14x14xf32>
    %243 = arith.addf %227, %242 : vector<14x14xf32>
    %c2_170 = arith.constant 2 : index
    %c3_171 = arith.constant 3 : index
    %244 = memref.load %arg3[%c2_170, %c3_171] : memref<4x8xf32, #tpu.memory_space<smem>>
    %245 = vector.broadcast %244 : f32 to vector<14x14xf32>
    %246 = arith.mulf %245, %219 : vector<14x14xf32>
    %247 = arith.addf %231, %246 : vector<14x14xf32>
    %c3_172 = arith.constant 3 : index
    %c3_173 = arith.constant 3 : index
    %248 = memref.load %arg3[%c3_172, %c3_173] : memref<4x8xf32, #tpu.memory_space<smem>>
    %249 = vector.broadcast %248 : f32 to vector<14x14xf32>
    %250 = arith.mulf %249, %219 : vector<14x14xf32>
    %251 = arith.addf %235, %250 : vector<14x14xf32>
    %cst_174 = arith.constant 0.000000e+00 : f32
    %252 = vector.broadcast %cst_174 : f32 to vector<14x14xf32>
    %cst_175 = arith.constant 0.000000e+00 : f32
    %253 = vector.broadcast %cst_175 : f32 to vector<14x14xf32>
    %c0_176 = arith.constant 0 : index
    %c2_177 = arith.constant 2 : index
    %c0_178 = arith.constant 0 : index
    %c0_179 = arith.constant 0 : index
    %254 = vector.load %arg1[%c0_176, %c2_177, %c0_178, %c0_179] : memref<1x4x16x16xf32, #tpu.memory_space<vmem>>, vector<1x1x14x14xf32>
    %255 = vector.shape_cast %254 : vector<1x1x14x14xf32> to vector<14x14xf32>
    %c4_180 = arith.constant 4 : index
    %c0_181 = arith.constant 0 : index
    %256 = memref.load %arg2[%c4_180, %c0_181] : memref<8x9xf32, #tpu.memory_space<smem>>
    %257 = vector.broadcast %256 : f32 to vector<14x14xf32>
    %258 = arith.mulf %257, %255 : vector<14x14xf32>
    %259 = arith.addf %252, %258 : vector<14x14xf32>
    %c5_182 = arith.constant 5 : index
    %c0_183 = arith.constant 0 : index
    %260 = memref.load %arg2[%c5_182, %c0_183] : memref<8x9xf32, #tpu.memory_space<smem>>
    %261 = vector.broadcast %260 : f32 to vector<14x14xf32>
    %262 = arith.mulf %261, %255 : vector<14x14xf32>
    %263 = arith.addf %253, %262 : vector<14x14xf32>
    %c0_184 = arith.constant 0 : index
    %c2_185 = arith.constant 2 : index
    %c0_186 = arith.constant 0 : index
    %c1_187 = arith.constant 1 : index
    %264 = vector.load %arg1[%c0_184, %c2_185, %c0_186, %c1_187] : memref<1x4x16x16xf32, #tpu.memory_space<vmem>>, vector<1x1x14x14xf32>
    %265 = vector.shape_cast %264 : vector<1x1x14x14xf32> to vector<14x14xf32>
    %c4_188 = arith.constant 4 : index
    %c1_189 = arith.constant 1 : index
    %266 = memref.load %arg2[%c4_188, %c1_189] : memref<8x9xf32, #tpu.memory_space<smem>>
    %267 = vector.broadcast %266 : f32 to vector<14x14xf32>
    %268 = arith.mulf %267, %265 : vector<14x14xf32>
    %269 = arith.addf %259, %268 : vector<14x14xf32>
    %c5_190 = arith.constant 5 : index
    %c1_191 = arith.constant 1 : index
    %270 = memref.load %arg2[%c5_190, %c1_191] : memref<8x9xf32, #tpu.memory_space<smem>>
    %271 = vector.broadcast %270 : f32 to vector<14x14xf32>
    %272 = arith.mulf %271, %265 : vector<14x14xf32>
    %273 = arith.addf %263, %272 : vector<14x14xf32>
    %c0_192 = arith.constant 0 : index
    %c2_193 = arith.constant 2 : index
    %c0_194 = arith.constant 0 : index
    %c2_195 = arith.constant 2 : index
    %274 = vector.load %arg1[%c0_192, %c2_193, %c0_194, %c2_195] : memref<1x4x16x16xf32, #tpu.memory_space<vmem>>, vector<1x1x14x14xf32>
    %275 = vector.shape_cast %274 : vector<1x1x14x14xf32> to vector<14x14xf32>
    %c4_196 = arith.constant 4 : index
    %c2_197 = arith.constant 2 : index
    %276 = memref.load %arg2[%c4_196, %c2_197] : memref<8x9xf32, #tpu.memory_space<smem>>
    %277 = vector.broadcast %276 : f32 to vector<14x14xf32>
    %278 = arith.mulf %277, %275 : vector<14x14xf32>
    %279 = arith.addf %269, %278 : vector<14x14xf32>
    %c5_198 = arith.constant 5 : index
    %c2_199 = arith.constant 2 : index
    %280 = memref.load %arg2[%c5_198, %c2_199] : memref<8x9xf32, #tpu.memory_space<smem>>
    %281 = vector.broadcast %280 : f32 to vector<14x14xf32>
    %282 = arith.mulf %281, %275 : vector<14x14xf32>
    %283 = arith.addf %273, %282 : vector<14x14xf32>
    %c0_200 = arith.constant 0 : index
    %c2_201 = arith.constant 2 : index
    %c1_202 = arith.constant 1 : index
    %c0_203 = arith.constant 0 : index
    %284 = vector.load %arg1[%c0_200, %c2_201, %c1_202, %c0_203] : memref<1x4x16x16xf32, #tpu.memory_space<vmem>>, vector<1x1x14x14xf32>
    %285 = vector.shape_cast %284 : vector<1x1x14x14xf32> to vector<14x14xf32>
    %c4_204 = arith.constant 4 : index
    %c3_205 = arith.constant 3 : index
    %286 = memref.load %arg2[%c4_204, %c3_205] : memref<8x9xf32, #tpu.memory_space<smem>>
    %287 = vector.broadcast %286 : f32 to vector<14x14xf32>
    %288 = arith.mulf %287, %285 : vector<14x14xf32>
    %289 = arith.addf %279, %288 : vector<14x14xf32>
    %c5_206 = arith.constant 5 : index
    %c3_207 = arith.constant 3 : index
    %290 = memref.load %arg2[%c5_206, %c3_207] : memref<8x9xf32, #tpu.memory_space<smem>>
    %291 = vector.broadcast %290 : f32 to vector<14x14xf32>
    %292 = arith.mulf %291, %285 : vector<14x14xf32>
    %293 = arith.addf %283, %292 : vector<14x14xf32>
    %c0_208 = arith.constant 0 : index
    %c2_209 = arith.constant 2 : index
    %c1_210 = arith.constant 1 : index
    %c1_211 = arith.constant 1 : index
    %294 = vector.load %arg1[%c0_208, %c2_209, %c1_210, %c1_211] : memref<1x4x16x16xf32, #tpu.memory_space<vmem>>, vector<1x1x14x14xf32>
    %295 = vector.shape_cast %294 : vector<1x1x14x14xf32> to vector<14x14xf32>
    %c4_212 = arith.constant 4 : index
    %c4_213 = arith.constant 4 : index
    %296 = memref.load %arg2[%c4_212, %c4_213] : memref<8x9xf32, #tpu.memory_space<smem>>
    %297 = vector.broadcast %296 : f32 to vector<14x14xf32>
    %298 = arith.mulf %297, %295 : vector<14x14xf32>
    %299 = arith.addf %289, %298 : vector<14x14xf32>
    %c5_214 = arith.constant 5 : index
    %c4_215 = arith.constant 4 : index
    %300 = memref.load %arg2[%c5_214, %c4_215] : memref<8x9xf32, #tpu.memory_space<smem>>
    %301 = vector.broadcast %300 : f32 to vector<14x14xf32>
    %302 = arith.mulf %301, %295 : vector<14x14xf32>
    %303 = arith.addf %293, %302 : vector<14x14xf32>
    %c0_216 = arith.constant 0 : index
    %c2_217 = arith.constant 2 : index
    %c1_218 = arith.constant 1 : index
    %c2_219 = arith.constant 2 : index
    %304 = vector.load %arg1[%c0_216, %c2_217, %c1_218, %c2_219] : memref<1x4x16x16xf32, #tpu.memory_space<vmem>>, vector<1x1x14x14xf32>
    %305 = vector.shape_cast %304 : vector<1x1x14x14xf32> to vector<14x14xf32>
    %c4_220 = arith.constant 4 : index
    %c5_221 = arith.constant 5 : index
    %306 = memref.load %arg2[%c4_220, %c5_221] : memref<8x9xf32, #tpu.memory_space<smem>>
    %307 = vector.broadcast %306 : f32 to vector<14x14xf32>
    %308 = arith.mulf %307, %305 : vector<14x14xf32>
    %309 = arith.addf %299, %308 : vector<14x14xf32>
    %c5_222 = arith.constant 5 : index
    %c5_223 = arith.constant 5 : index
    %310 = memref.load %arg2[%c5_222, %c5_223] : memref<8x9xf32, #tpu.memory_space<smem>>
    %311 = vector.broadcast %310 : f32 to vector<14x14xf32>
    %312 = arith.mulf %311, %305 : vector<14x14xf32>
    %313 = arith.addf %303, %312 : vector<14x14xf32>
    %c0_224 = arith.constant 0 : index
    %c2_225 = arith.constant 2 : index
    %c2_226 = arith.constant 2 : index
    %c0_227 = arith.constant 0 : index
    %314 = vector.load %arg1[%c0_224, %c2_225, %c2_226, %c0_227] : memref<1x4x16x16xf32, #tpu.memory_space<vmem>>, vector<1x1x14x14xf32>
    %315 = vector.shape_cast %314 : vector<1x1x14x14xf32> to vector<14x14xf32>
    %c4_228 = arith.constant 4 : index
    %c6_229 = arith.constant 6 : index
    %316 = memref.load %arg2[%c4_228, %c6_229] : memref<8x9xf32, #tpu.memory_space<smem>>
    %317 = vector.broadcast %316 : f32 to vector<14x14xf32>
    %318 = arith.mulf %317, %315 : vector<14x14xf32>
    %319 = arith.addf %309, %318 : vector<14x14xf32>
    %c5_230 = arith.constant 5 : index
    %c6_231 = arith.constant 6 : index
    %320 = memref.load %arg2[%c5_230, %c6_231] : memref<8x9xf32, #tpu.memory_space<smem>>
    %321 = vector.broadcast %320 : f32 to vector<14x14xf32>
    %322 = arith.mulf %321, %315 : vector<14x14xf32>
    %323 = arith.addf %313, %322 : vector<14x14xf32>
    %c0_232 = arith.constant 0 : index
    %c2_233 = arith.constant 2 : index
    %c2_234 = arith.constant 2 : index
    %c1_235 = arith.constant 1 : index
    %324 = vector.load %arg1[%c0_232, %c2_233, %c2_234, %c1_235] : memref<1x4x16x16xf32, #tpu.memory_space<vmem>>, vector<1x1x14x14xf32>
    %325 = vector.shape_cast %324 : vector<1x1x14x14xf32> to vector<14x14xf32>
    %c4_236 = arith.constant 4 : index
    %c7_237 = arith.constant 7 : index
    %326 = memref.load %arg2[%c4_236, %c7_237] : memref<8x9xf32, #tpu.memory_space<smem>>
    %327 = vector.broadcast %326 : f32 to vector<14x14xf32>
    %328 = arith.mulf %327, %325 : vector<14x14xf32>
    %329 = arith.addf %319, %328 : vector<14x14xf32>
    %c5_238 = arith.constant 5 : index
    %c7_239 = arith.constant 7 : index
    %330 = memref.load %arg2[%c5_238, %c7_239] : memref<8x9xf32, #tpu.memory_space<smem>>
    %331 = vector.broadcast %330 : f32 to vector<14x14xf32>
    %332 = arith.mulf %331, %325 : vector<14x14xf32>
    %333 = arith.addf %323, %332 : vector<14x14xf32>
    %c0_240 = arith.constant 0 : index
    %c2_241 = arith.constant 2 : index
    %c2_242 = arith.constant 2 : index
    %c2_243 = arith.constant 2 : index
    %334 = vector.load %arg1[%c0_240, %c2_241, %c2_242, %c2_243] : memref<1x4x16x16xf32, #tpu.memory_space<vmem>>, vector<1x1x14x14xf32>
    %335 = vector.shape_cast %334 : vector<1x1x14x14xf32> to vector<14x14xf32>
    %c4_244 = arith.constant 4 : index
    %c8_245 = arith.constant 8 : index
    %336 = memref.load %arg2[%c4_244, %c8_245] : memref<8x9xf32, #tpu.memory_space<smem>>
    %337 = vector.broadcast %336 : f32 to vector<14x14xf32>
    %338 = arith.mulf %337, %335 : vector<14x14xf32>
    %339 = arith.addf %329, %338 : vector<14x14xf32>
    %c5_246 = arith.constant 5 : index
    %c8_247 = arith.constant 8 : index
    %340 = memref.load %arg2[%c5_246, %c8_247] : memref<8x9xf32, #tpu.memory_space<smem>>
    %341 = vector.broadcast %340 : f32 to vector<14x14xf32>
    %342 = arith.mulf %341, %335 : vector<14x14xf32>
    %343 = arith.addf %333, %342 : vector<14x14xf32>
    %c0_248 = arith.constant 0 : index
    %c4_249 = arith.constant 4 : index
    %344 = memref.load %arg3[%c0_248, %c4_249] : memref<4x8xf32, #tpu.memory_space<smem>>
    %345 = vector.broadcast %344 : f32 to vector<14x14xf32>
    %346 = arith.mulf %345, %339 : vector<14x14xf32>
    %347 = arith.addf %239, %346 : vector<14x14xf32>
    %c1_250 = arith.constant 1 : index
    %c4_251 = arith.constant 4 : index
    %348 = memref.load %arg3[%c1_250, %c4_251] : memref<4x8xf32, #tpu.memory_space<smem>>
    %349 = vector.broadcast %348 : f32 to vector<14x14xf32>
    %350 = arith.mulf %349, %339 : vector<14x14xf32>
    %351 = arith.addf %243, %350 : vector<14x14xf32>
    %c2_252 = arith.constant 2 : index
    %c4_253 = arith.constant 4 : index
    %352 = memref.load %arg3[%c2_252, %c4_253] : memref<4x8xf32, #tpu.memory_space<smem>>
    %353 = vector.broadcast %352 : f32 to vector<14x14xf32>
    %354 = arith.mulf %353, %339 : vector<14x14xf32>
    %355 = arith.addf %247, %354 : vector<14x14xf32>
    %c3_254 = arith.constant 3 : index
    %c4_255 = arith.constant 4 : index
    %356 = memref.load %arg3[%c3_254, %c4_255] : memref<4x8xf32, #tpu.memory_space<smem>>
    %357 = vector.broadcast %356 : f32 to vector<14x14xf32>
    %358 = arith.mulf %357, %339 : vector<14x14xf32>
    %359 = arith.addf %251, %358 : vector<14x14xf32>
    %c0_256 = arith.constant 0 : index
    %c5_257 = arith.constant 5 : index
    %360 = memref.load %arg3[%c0_256, %c5_257] : memref<4x8xf32, #tpu.memory_space<smem>>
    %361 = vector.broadcast %360 : f32 to vector<14x14xf32>
    %362 = arith.mulf %361, %343 : vector<14x14xf32>
    %363 = arith.addf %347, %362 : vector<14x14xf32>
    %c1_258 = arith.constant 1 : index
    %c5_259 = arith.constant 5 : index
    %364 = memref.load %arg3[%c1_258, %c5_259] : memref<4x8xf32, #tpu.memory_space<smem>>
    %365 = vector.broadcast %364 : f32 to vector<14x14xf32>
    %366 = arith.mulf %365, %343 : vector<14x14xf32>
    %367 = arith.addf %351, %366 : vector<14x14xf32>
    %c2_260 = arith.constant 2 : index
    %c5_261 = arith.constant 5 : index
    %368 = memref.load %arg3[%c2_260, %c5_261] : memref<4x8xf32, #tpu.memory_space<smem>>
    %369 = vector.broadcast %368 : f32 to vector<14x14xf32>
    %370 = arith.mulf %369, %343 : vector<14x14xf32>
    %371 = arith.addf %355, %370 : vector<14x14xf32>
    %c3_262 = arith.constant 3 : index
    %c5_263 = arith.constant 5 : index
    %372 = memref.load %arg3[%c3_262, %c5_263] : memref<4x8xf32, #tpu.memory_space<smem>>
    %373 = vector.broadcast %372 : f32 to vector<14x14xf32>
    %374 = arith.mulf %373, %343 : vector<14x14xf32>
    %375 = arith.addf %359, %374 : vector<14x14xf32>
    %cst_264 = arith.constant 0.000000e+00 : f32
    %376 = vector.broadcast %cst_264 : f32 to vector<14x14xf32>
    %cst_265 = arith.constant 0.000000e+00 : f32
    %377 = vector.broadcast %cst_265 : f32 to vector<14x14xf32>
    %c0_266 = arith.constant 0 : index
    %c3_267 = arith.constant 3 : index
    %c0_268 = arith.constant 0 : index
    %c0_269 = arith.constant 0 : index
    %378 = vector.load %arg1[%c0_266, %c3_267, %c0_268, %c0_269] : memref<1x4x16x16xf32, #tpu.memory_space<vmem>>, vector<1x1x14x14xf32>
    %379 = vector.shape_cast %378 : vector<1x1x14x14xf32> to vector<14x14xf32>
    %c6_270 = arith.constant 6 : index
    %c0_271 = arith.constant 0 : index
    %380 = memref.load %arg2[%c6_270, %c0_271] : memref<8x9xf32, #tpu.memory_space<smem>>
    %381 = vector.broadcast %380 : f32 to vector<14x14xf32>
    %382 = arith.mulf %381, %379 : vector<14x14xf32>
    %383 = arith.addf %376, %382 : vector<14x14xf32>
    %c7_272 = arith.constant 7 : index
    %c0_273 = arith.constant 0 : index
    %384 = memref.load %arg2[%c7_272, %c0_273] : memref<8x9xf32, #tpu.memory_space<smem>>
    %385 = vector.broadcast %384 : f32 to vector<14x14xf32>
    %386 = arith.mulf %385, %379 : vector<14x14xf32>
    %387 = arith.addf %377, %386 : vector<14x14xf32>
    %c0_274 = arith.constant 0 : index
    %c3_275 = arith.constant 3 : index
    %c0_276 = arith.constant 0 : index
    %c1_277 = arith.constant 1 : index
    %388 = vector.load %arg1[%c0_274, %c3_275, %c0_276, %c1_277] : memref<1x4x16x16xf32, #tpu.memory_space<vmem>>, vector<1x1x14x14xf32>
    %389 = vector.shape_cast %388 : vector<1x1x14x14xf32> to vector<14x14xf32>
    %c6_278 = arith.constant 6 : index
    %c1_279 = arith.constant 1 : index
    %390 = memref.load %arg2[%c6_278, %c1_279] : memref<8x9xf32, #tpu.memory_space<smem>>
    %391 = vector.broadcast %390 : f32 to vector<14x14xf32>
    %392 = arith.mulf %391, %389 : vector<14x14xf32>
    %393 = arith.addf %383, %392 : vector<14x14xf32>
    %c7_280 = arith.constant 7 : index
    %c1_281 = arith.constant 1 : index
    %394 = memref.load %arg2[%c7_280, %c1_281] : memref<8x9xf32, #tpu.memory_space<smem>>
    %395 = vector.broadcast %394 : f32 to vector<14x14xf32>
    %396 = arith.mulf %395, %389 : vector<14x14xf32>
    %397 = arith.addf %387, %396 : vector<14x14xf32>
    %c0_282 = arith.constant 0 : index
    %c3_283 = arith.constant 3 : index
    %c0_284 = arith.constant 0 : index
    %c2_285 = arith.constant 2 : index
    %398 = vector.load %arg1[%c0_282, %c3_283, %c0_284, %c2_285] : memref<1x4x16x16xf32, #tpu.memory_space<vmem>>, vector<1x1x14x14xf32>
    %399 = vector.shape_cast %398 : vector<1x1x14x14xf32> to vector<14x14xf32>
    %c6_286 = arith.constant 6 : index
    %c2_287 = arith.constant 2 : index
    %400 = memref.load %arg2[%c6_286, %c2_287] : memref<8x9xf32, #tpu.memory_space<smem>>
    %401 = vector.broadcast %400 : f32 to vector<14x14xf32>
    %402 = arith.mulf %401, %399 : vector<14x14xf32>
    %403 = arith.addf %393, %402 : vector<14x14xf32>
    %c7_288 = arith.constant 7 : index
    %c2_289 = arith.constant 2 : index
    %404 = memref.load %arg2[%c7_288, %c2_289] : memref<8x9xf32, #tpu.memory_space<smem>>
    %405 = vector.broadcast %404 : f32 to vector<14x14xf32>
    %406 = arith.mulf %405, %399 : vector<14x14xf32>
    %407 = arith.addf %397, %406 : vector<14x14xf32>
    %c0_290 = arith.constant 0 : index
    %c3_291 = arith.constant 3 : index
    %c1_292 = arith.constant 1 : index
    %c0_293 = arith.constant 0 : index
    %408 = vector.load %arg1[%c0_290, %c3_291, %c1_292, %c0_293] : memref<1x4x16x16xf32, #tpu.memory_space<vmem>>, vector<1x1x14x14xf32>
    %409 = vector.shape_cast %408 : vector<1x1x14x14xf32> to vector<14x14xf32>
    %c6_294 = arith.constant 6 : index
    %c3_295 = arith.constant 3 : index
    %410 = memref.load %arg2[%c6_294, %c3_295] : memref<8x9xf32, #tpu.memory_space<smem>>
    %411 = vector.broadcast %410 : f32 to vector<14x14xf32>
    %412 = arith.mulf %411, %409 : vector<14x14xf32>
    %413 = arith.addf %403, %412 : vector<14x14xf32>
    %c7_296 = arith.constant 7 : index
    %c3_297 = arith.constant 3 : index
    %414 = memref.load %arg2[%c7_296, %c3_297] : memref<8x9xf32, #tpu.memory_space<smem>>
    %415 = vector.broadcast %414 : f32 to vector<14x14xf32>
    %416 = arith.mulf %415, %409 : vector<14x14xf32>
    %417 = arith.addf %407, %416 : vector<14x14xf32>
    %c0_298 = arith.constant 0 : index
    %c3_299 = arith.constant 3 : index
    %c1_300 = arith.constant 1 : index
    %c1_301 = arith.constant 1 : index
    %418 = vector.load %arg1[%c0_298, %c3_299, %c1_300, %c1_301] : memref<1x4x16x16xf32, #tpu.memory_space<vmem>>, vector<1x1x14x14xf32>
    %419 = vector.shape_cast %418 : vector<1x1x14x14xf32> to vector<14x14xf32>
    %c6_302 = arith.constant 6 : index
    %c4_303 = arith.constant 4 : index
    %420 = memref.load %arg2[%c6_302, %c4_303] : memref<8x9xf32, #tpu.memory_space<smem>>
    %421 = vector.broadcast %420 : f32 to vector<14x14xf32>
    %422 = arith.mulf %421, %419 : vector<14x14xf32>
    %423 = arith.addf %413, %422 : vector<14x14xf32>
    %c7_304 = arith.constant 7 : index
    %c4_305 = arith.constant 4 : index
    %424 = memref.load %arg2[%c7_304, %c4_305] : memref<8x9xf32, #tpu.memory_space<smem>>
    %425 = vector.broadcast %424 : f32 to vector<14x14xf32>
    %426 = arith.mulf %425, %419 : vector<14x14xf32>
    %427 = arith.addf %417, %426 : vector<14x14xf32>
    %c0_306 = arith.constant 0 : index
    %c3_307 = arith.constant 3 : index
    %c1_308 = arith.constant 1 : index
    %c2_309 = arith.constant 2 : index
    %428 = vector.load %arg1[%c0_306, %c3_307, %c1_308, %c2_309] : memref<1x4x16x16xf32, #tpu.memory_space<vmem>>, vector<1x1x14x14xf32>
    %429 = vector.shape_cast %428 : vector<1x1x14x14xf32> to vector<14x14xf32>
    %c6_310 = arith.constant 6 : index
    %c5_311 = arith.constant 5 : index
    %430 = memref.load %arg2[%c6_310, %c5_311] : memref<8x9xf32, #tpu.memory_space<smem>>
    %431 = vector.broadcast %430 : f32 to vector<14x14xf32>
    %432 = arith.mulf %431, %429 : vector<14x14xf32>
    %433 = arith.addf %423, %432 : vector<14x14xf32>
    %c7_312 = arith.constant 7 : index
    %c5_313 = arith.constant 5 : index
    %434 = memref.load %arg2[%c7_312, %c5_313] : memref<8x9xf32, #tpu.memory_space<smem>>
    %435 = vector.broadcast %434 : f32 to vector<14x14xf32>
    %436 = arith.mulf %435, %429 : vector<14x14xf32>
    %437 = arith.addf %427, %436 : vector<14x14xf32>
    %c0_314 = arith.constant 0 : index
    %c3_315 = arith.constant 3 : index
    %c2_316 = arith.constant 2 : index
    %c0_317 = arith.constant 0 : index
    %438 = vector.load %arg1[%c0_314, %c3_315, %c2_316, %c0_317] : memref<1x4x16x16xf32, #tpu.memory_space<vmem>>, vector<1x1x14x14xf32>
    %439 = vector.shape_cast %438 : vector<1x1x14x14xf32> to vector<14x14xf32>
    %c6_318 = arith.constant 6 : index
    %c6_319 = arith.constant 6 : index
    %440 = memref.load %arg2[%c6_318, %c6_319] : memref<8x9xf32, #tpu.memory_space<smem>>
    %441 = vector.broadcast %440 : f32 to vector<14x14xf32>
    %442 = arith.mulf %441, %439 : vector<14x14xf32>
    %443 = arith.addf %433, %442 : vector<14x14xf32>
    %c7_320 = arith.constant 7 : index
    %c6_321 = arith.constant 6 : index
    %444 = memref.load %arg2[%c7_320, %c6_321] : memref<8x9xf32, #tpu.memory_space<smem>>
    %445 = vector.broadcast %444 : f32 to vector<14x14xf32>
    %446 = arith.mulf %445, %439 : vector<14x14xf32>
    %447 = arith.addf %437, %446 : vector<14x14xf32>
    %c0_322 = arith.constant 0 : index
    %c3_323 = arith.constant 3 : index
    %c2_324 = arith.constant 2 : index
    %c1_325 = arith.constant 1 : index
    %448 = vector.load %arg1[%c0_322, %c3_323, %c2_324, %c1_325] : memref<1x4x16x16xf32, #tpu.memory_space<vmem>>, vector<1x1x14x14xf32>
    %449 = vector.shape_cast %448 : vector<1x1x14x14xf32> to vector<14x14xf32>
    %c6_326 = arith.constant 6 : index
    %c7_327 = arith.constant 7 : index
    %450 = memref.load %arg2[%c6_326, %c7_327] : memref<8x9xf32, #tpu.memory_space<smem>>
    %451 = vector.broadcast %450 : f32 to vector<14x14xf32>
    %452 = arith.mulf %451, %449 : vector<14x14xf32>
    %453 = arith.addf %443, %452 : vector<14x14xf32>
    %c7_328 = arith.constant 7 : index
    %c7_329 = arith.constant 7 : index
    %454 = memref.load %arg2[%c7_328, %c7_329] : memref<8x9xf32, #tpu.memory_space<smem>>
    %455 = vector.broadcast %454 : f32 to vector<14x14xf32>
    %456 = arith.mulf %455, %449 : vector<14x14xf32>
    %457 = arith.addf %447, %456 : vector<14x14xf32>
    %c0_330 = arith.constant 0 : index
    %c3_331 = arith.constant 3 : index
    %c2_332 = arith.constant 2 : index
    %c2_333 = arith.constant 2 : index
    %458 = vector.load %arg1[%c0_330, %c3_331, %c2_332, %c2_333] : memref<1x4x16x16xf32, #tpu.memory_space<vmem>>, vector<1x1x14x14xf32>
    %459 = vector.shape_cast %458 : vector<1x1x14x14xf32> to vector<14x14xf32>
    %c6_334 = arith.constant 6 : index
    %c8_335 = arith.constant 8 : index
    %460 = memref.load %arg2[%c6_334, %c8_335] : memref<8x9xf32, #tpu.memory_space<smem>>
    %461 = vector.broadcast %460 : f32 to vector<14x14xf32>
    %462 = arith.mulf %461, %459 : vector<14x14xf32>
    %463 = arith.addf %453, %462 : vector<14x14xf32>
    %c7_336 = arith.constant 7 : index
    %c8_337 = arith.constant 8 : index
    %464 = memref.load %arg2[%c7_336, %c8_337] : memref<8x9xf32, #tpu.memory_space<smem>>
    %465 = vector.broadcast %464 : f32 to vector<14x14xf32>
    %466 = arith.mulf %465, %459 : vector<14x14xf32>
    %467 = arith.addf %457, %466 : vector<14x14xf32>
    %c0_338 = arith.constant 0 : index
    %c6_339 = arith.constant 6 : index
    %468 = memref.load %arg3[%c0_338, %c6_339] : memref<4x8xf32, #tpu.memory_space<smem>>
    %469 = vector.broadcast %468 : f32 to vector<14x14xf32>
    %470 = arith.mulf %469, %463 : vector<14x14xf32>
    %471 = arith.addf %363, %470 : vector<14x14xf32>
    %c1_340 = arith.constant 1 : index
    %c6_341 = arith.constant 6 : index
    %472 = memref.load %arg3[%c1_340, %c6_341] : memref<4x8xf32, #tpu.memory_space<smem>>
    %473 = vector.broadcast %472 : f32 to vector<14x14xf32>
    %474 = arith.mulf %473, %463 : vector<14x14xf32>
    %475 = arith.addf %367, %474 : vector<14x14xf32>
    %c2_342 = arith.constant 2 : index
    %c6_343 = arith.constant 6 : index
    %476 = memref.load %arg3[%c2_342, %c6_343] : memref<4x8xf32, #tpu.memory_space<smem>>
    %477 = vector.broadcast %476 : f32 to vector<14x14xf32>
    %478 = arith.mulf %477, %463 : vector<14x14xf32>
    %479 = arith.addf %371, %478 : vector<14x14xf32>
    %c3_344 = arith.constant 3 : index
    %c6_345 = arith.constant 6 : index
    %480 = memref.load %arg3[%c3_344, %c6_345] : memref<4x8xf32, #tpu.memory_space<smem>>
    %481 = vector.broadcast %480 : f32 to vector<14x14xf32>
    %482 = arith.mulf %481, %463 : vector<14x14xf32>
    %483 = arith.addf %375, %482 : vector<14x14xf32>
    %c0_346 = arith.constant 0 : index
    %c7_347 = arith.constant 7 : index
    %484 = memref.load %arg3[%c0_346, %c7_347] : memref<4x8xf32, #tpu.memory_space<smem>>
    %485 = vector.broadcast %484 : f32 to vector<14x14xf32>
    %486 = arith.mulf %485, %467 : vector<14x14xf32>
    %487 = arith.addf %471, %486 : vector<14x14xf32>
    %c1_348 = arith.constant 1 : index
    %c7_349 = arith.constant 7 : index
    %488 = memref.load %arg3[%c1_348, %c7_349] : memref<4x8xf32, #tpu.memory_space<smem>>
    %489 = vector.broadcast %488 : f32 to vector<14x14xf32>
    %490 = arith.mulf %489, %467 : vector<14x14xf32>
    %491 = arith.addf %475, %490 : vector<14x14xf32>
    %c2_350 = arith.constant 2 : index
    %c7_351 = arith.constant 7 : index
    %492 = memref.load %arg3[%c2_350, %c7_351] : memref<4x8xf32, #tpu.memory_space<smem>>
    %493 = vector.broadcast %492 : f32 to vector<14x14xf32>
    %494 = arith.mulf %493, %467 : vector<14x14xf32>
    %495 = arith.addf %479, %494 : vector<14x14xf32>
    %c3_352 = arith.constant 3 : index
    %c7_353 = arith.constant 7 : index
    %496 = memref.load %arg3[%c3_352, %c7_353] : memref<4x8xf32, #tpu.memory_space<smem>>
    %497 = vector.broadcast %496 : f32 to vector<14x14xf32>
    %498 = arith.mulf %497, %467 : vector<14x14xf32>
    %499 = arith.addf %483, %498 : vector<14x14xf32>
    %c0_354 = arith.constant 0 : index
    %c0_355 = arith.constant 0 : index
    %c0_356 = arith.constant 0 : index
    %c0_357 = arith.constant 0 : index
    %500 = vector.load %arg4[%c0_354, %c0_355, %c0_356, %c0_357] : memref<1x4x14x14xf32, #tpu.memory_space<vmem>>, vector<1x1x14x14xf32>
    %501 = vector.shape_cast %500 : vector<1x1x14x14xf32> to vector<14x14xf32>
    %502 = vector.shape_cast %487 : vector<14x14xf32> to vector<1x1x14x14xf32>
    tpu.vector_store %arg4[%c0_354, %c0_355, %c0_356, %c0_357], %502 {strides = array<i32>} : memref<1x4x14x14xf32, #tpu.memory_space<vmem>>, vector<1x1x14x14xf32>,
    %c0_358 = arith.constant 0 : index
    %c1_359 = arith.constant 1 : index
    %c0_360 = arith.constant 0 : index
    %c0_361 = arith.constant 0 : index
    %503 = vector.load %arg4[%c0_358, %c1_359, %c0_360, %c0_361] : memref<1x4x14x14xf32, #tpu.memory_space<vmem>>, vector<1x1x14x14xf32>
    %504 = vector.shape_cast %503 : vector<1x1x14x14xf32> to vector<14x14xf32>
    %505 = vector.shape_cast %491 : vector<14x14xf32> to vector<1x1x14x14xf32>
    tpu.vector_store %arg4[%c0_358, %c1_359, %c0_360, %c0_361], %505 {strides = array<i32>} : memref<1x4x14x14xf32, #tpu.memory_space<vmem>>, vector<1x1x14x14xf32>,
    %c0_362 = arith.constant 0 : index
    %c2_363 = arith.constant 2 : index
    %c0_364 = arith.constant 0 : index
    %c0_365 = arith.constant 0 : index
    %506 = vector.load %arg4[%c0_362, %c2_363, %c0_364, %c0_365] : memref<1x4x14x14xf32, #tpu.memory_space<vmem>>, vector<1x1x14x14xf32>
    %507 = vector.shape_cast %506 : vector<1x1x14x14xf32> to vector<14x14xf32>
    %508 = vector.shape_cast %495 : vector<14x14xf32> to vector<1x1x14x14xf32>
    tpu.vector_store %arg4[%c0_362, %c2_363, %c0_364, %c0_365], %508 {strides = array<i32>} : memref<1x4x14x14xf32, #tpu.memory_space<vmem>>, vector<1x1x14x14xf32>,
    %c0_366 = arith.constant 0 : index
    %c3_367 = arith.constant 3 : index
    %c0_368 = arith.constant 0 : index
    %c0_369 = arith.constant 0 : index
    %509 = vector.load %arg4[%c0_366, %c3_367, %c0_368, %c0_369] : memref<1x4x14x14xf32, #tpu.memory_space<vmem>>, vector<1x1x14x14xf32>
    %510 = vector.shape_cast %509 : vector<1x1x14x14xf32> to vector<14x14xf32>
    %511 = vector.shape_cast %499 : vector<14x14xf32> to vector<1x1x14x14xf32>
    tpu.vector_store %arg4[%c0_366, %c3_367, %c0_368, %c0_369], %511 {strides = array<i32>} : memref<1x4x14x14xf32, #tpu.memory_space<vmem>>, vector<1x1x14x14xf32>,
    return
  }
  func.func @transform_0(%arg0: i32) -> (i32, i32, i32, i32) {
    %c0_i32 = arith.constant 0 : i32
    %c0_i32_0 = arith.constant 0 : i32
    %c0_i32_1 = arith.constant 0 : i32
    %c0_i32_2 = arith.constant 0 : i32
    return %arg0, %c0_i32, %c0_i32_0, %c0_i32_1 : i32, i32, i32, i32
  }
  func.func @transform_1(%arg0: i32) -> (i32, i32) {
    %c0_i32 = arith.constant 0 : i32
    %c0_i32_0 = arith.constant 0 : i32
    %c0_i32_1 = arith.constant 0 : i32
    return %c0_i32, %c0_i32_0 : i32, i32
  }
  func.func @transform_2(%arg0: i32) -> (i32, i32) {
    %c0_i32 = arith.constant 0 : i32
    %c0_i32_0 = arith.constant 0 : i32
    %c0_i32_1 = arith.constant 0 : i32
    return %c0_i32, %c0_i32_0 : i32, i32
  }
  func.func @transform_3(%arg0: i32) -> (i32, i32, i32, i32) {
    %c0_i32 = arith.constant 0 : i32
    %c0_i32_0 = arith.constant 0 : i32
    %c0_i32_1 = arith.constant 0 : i32
    %c0_i32_2 = arith.constant 0 : i32
    return %arg0, %c0_i32, %c0_i32_0, %c0_i32_1 : i32, i32, i32, i32
  }
}

</mosaic_0001>

<llo_original>
// kernel: tpu_custom_call.1
$region0: #{tpu_custom_call.1}
  #allocation0 [shape = 'u32[]', space=smem, size = 0x4, offset = 0x4, fixed_abs, tag = 'smem constant byte address 0x4 - core index']
  #allocation1 [shape = 'u32[144,128]{1,0:T(1,128)}', space=vmem, size = 0x12000, scoped, tag = 'internal scratch']
  %s0 = inlined_call_operand.hbm [shape: f32[2,4,16,16], index: 0, kind: input, shape index: {}]
  %s1 = inlined_call_operand.hbm [shape: f32[8,9], index: 1, kind: input, shape index: {}]
  %s2 = inlined_call_operand.vmem [shape: f32[4,8], index: 2, kind: input, shape index: {}]
  %s3 = inlined_call_operand.vmem [shape: f32[2,4,14,14], index: 3, kind: output, shape index: {}]
  %s4 = sld [smem:[#allocation0]]
  $region57: #{tpu_custom_call.1} parent=0
    _
  %s6 = ssub.s32 1, %s4
  %s7 = scalar_select 0, %s6, %s4
  $region1: #{tpu_custom_call.1} parent=0
    #allocation2 [shape = 'u8[65536]{0}', space=vmem, size = 0x10000, scoped, tag = 'input window, operand 0']
    #allocation3 [shape = 's32[2]{0}', space=sflag, size = 0x8, scoped, tag = 'scoped memory for tpu_custom_call.1']
    #allocation4 [shape = 's32[2]{0}', space=sflag, size = 0x8, scoped, tag = 'scoped memory for tpu_custom_call.1']
    #allocation5 [shape = 's32[2]{0}', space=sflag, size = 0x8, scoped, tag = 'scoped memory for tpu_custom_call.1']
    #allocation6 [shape = 'u8[4096]{0}', space=smem, size = 0x1000, scoped, tag = 'input window, operand 1, single buffered']
    #allocation7 [shape = 'u8[2048]{0}', space=smem, size = 0x800, scoped, tag = 'input window, operand 2, single buffered']
    %8 = vsyncpa [#allocation3], 0
    %s9 = scalar_lea.sflag [#allocation3], 1
    %10 = vsyncpa %s9, 0
    %11 = vsyncpa [#allocation4], 0
    %12 = vsyncpa [#allocation5], 0
    loop: start=0, step=1, limit=4
    $region2: #{tpu_custom_call.1} parent=1 // loop_pre_header
      _
    $region3: #{tpu_custom_call.1} parent=1 // loop_header
      %s14 = sphi 0, %s18
      %p15 = scmp.ge.s32.totalorder %s14, 4
      %s24 = sphi 0, %s26
      %s27 = sphi 0, %s24
      %s28 = sphi 0, %s27
      %s44 = sphi 0, %s28
      %s48 = sphi 0, %s48
      %s50 = sphi 0, %s48
      %s51 = sphi 0, %s50
      %s65 = sphi 0, %s51
      %s69 = sphi 0, %s69
      %s71 = sphi 0, %s69
      %s72 = sphi 0, %s71
      %s86 = sphi 0, %s72
      %s92 = sphi 0, %s94
      %s95 = sphi 0, %s92
      %s96 = sphi 0, %s95
      %s112 = sphi 0, %s96
    $region4: #{tpu_custom_call.1} parent=1 // loop_header_branch
      %17 = sbr.rel (%p15) target = $region8
    $region5: #{tpu_custom_call.1} parent=1 // loop_body
      %s19 = ssub.s32 %s14, 1
      %s20 = ssub.s32 %s14, 2
      %s21 = sadd.s32 %s14, 1
      %s22 = ssub.s32 %s14, %s21
      %p23 = scmp.eq.s32.totalorder %s22, 0
      %s25 = sadd.s32 %s24, 1
      %s26 = scalar_select %p23, %s24, %s25
      %p29 = pneg %p23
      %p30 = scmp.eq.s32.totalorder %s14, 1
      %p31 = por %p29, %p30
      %p32 = scmp.ne.s32.totalorder %s24, %s27
      %p33 = scmp.eq.s32.totalorder %s14, 0
      %p34 = por %p32, %p33
      %p35 = scmp.ne.s32.totalorder %s24, %s27
      %p36 = scmp.eq.s32.totalorder %s19, 1
      %p37 = por %p35, %p36
      %p38 = scmp.ne.s32.totalorder %s27, %s28
      %p39 = scmp.eq.s32.totalorder %s19, 0
      %p40 = por %p38, %p39
      %p41 = scmp.ne.s32.totalorder %s27, %s28
      %p42 = scmp.eq.s32.totalorder %s20, 1
      %p43 = por %p41, %p42
      %p45 = scmp.ne.s32.totalorder %s28, %s44
      %p46 = scmp.eq.s32.totalorder %s20, 0
      %p47 = por %p45, %p46
      %s49 = sadd.s32 %s48, 1
      %p52 = scmp.eq.s32.totalorder %s14, 1
      %p53 = scmp.ne.s32.totalorder %s48, %s50
      %p54 = scmp.eq.s32.totalorder %s14, 0
      %p55 = por %p53, %p54
      %p56 = scmp.ne.s32.totalorder %s48, %s50
      %p57 = scmp.eq.s32.totalorder %s19, 1
      %p58 = por %p56, %p57
      %p59 = scmp.ne.s32.totalorder %s50, %s51
      %p60 = scmp.eq.s32.totalorder %s19, 0
      %p61 = por %p59, %p60
      %p62 = scmp.ne.s32.totalorder %s50, %s51
      %p63 = scmp.eq.s32.totalorder %s20, 1
      %p64 = por %p62, %p63
      %p66 = scmp.ne.s32.totalorder %s51, %s65
      %p67 = scmp.eq.s32.totalorder %s20, 0
      %p68 = por %p66, %p67
      %s70 = sadd.s32 %s69, 1
      %p73 = scmp.eq.s32.totalorder %s14, 1
      %p74 = scmp.ne.s32.totalorder %s69, %s71
      %p75 = scmp.eq.s32.totalorder %s14, 0
      %p76 = por %p74, %p75
      %p77 = scmp.ne.s32.totalorder %s69, %s71
      %p78 = scmp.eq.s32.totalorder %s19, 1
      %p79 = por %p77, %p78
      %p80 = scmp.ne.s32.totalorder %s71, %s72
      %p81 = scmp.eq.s32.totalorder %s19, 0
      %p82 = por %p80, %p81
      %p83 = scmp.ne.s32.totalorder %s71, %s72
      %p84 = scmp.eq.s32.totalorder %s20, 1
      %p85 = por %p83, %p84
      %p87 = scmp.ne.s32.totalorder %s72, %s86
      %p88 = scmp.eq.s32.totalorder %s20, 0
      %p89 = por %p87, %p88
      %s90 = ssub.s32 %s14, %s21
      %p91 = scmp.eq.s32.totalorder %s90, 0
      %s93 = sadd.s32 %s92, 1
      %s94 = scalar_select %p91, %s92, %s93
      %p97 = pneg %p91
      %p98 = scmp.eq.s32.totalorder %s14, 1
      %p99 = por %p97, %p98
      %p100 = scmp.ne.s32.totalorder %s92, %s95
      %p101 = scmp.eq.s32.totalorder %s14, 0
      %p102 = por %p100, %p101
      %p103 = scmp.ne.s32.totalorder %s92, %s95
      %p104 = scmp.eq.s32.totalorder %s19, 1
      %p105 = por %p103, %p104
      %p106 = scmp.ne.s32.totalorder %s95, %s96
      %p107 = scmp.eq.s32.totalorder %s19, 0
      %p108 = por %p106, %p107
      %p109 = scmp.ne.s32.totalorder %s95, %s96
      %p110 = scmp.eq.s32.totalorder %s20, 1
      %p111 = por %p109, %p110
      %p113 = scmp.ne.s32.totalorder %s96, %s112
      %p114 = scmp.eq.s32.totalorder %s20, 0
      %p115 = por %p113, %p114
      %p116 = scmp.le.s32.totalorder 1, %s14
      %p117 = scmp.lt.s32.totalorder %s14, 3
      %p118 = pnand %p116, %p117
      %p119 = pneg %p118
      // Predicated region
      $region9: #{tpu_custom_call.1} parent=5 // pred_check
        _
      $region10: #{tpu_custom_call.1} parent=5 // pred_check_branch
        %121 = sbr.rel (%p118) target = $region12
      $region11: #{tpu_custom_call.1} parent=5 // pred_region
        %s122 = ssub.s32 %s14, 1
        // Predicated region
        $region13: #{tpu_custom_call.1} parent=11 // pred_check
          %p123 = pneg %p61
        $region14: #{tpu_custom_call.1} parent=11 // pred_check_branch
          %125 = sbr.rel (%p123) target = $region16
        $region15: #{tpu_custom_call.1} parent=11 // pred_region
          %s127 = ssub.s32 128, 128
          %128 = vsyncadd [#allocation4], %s127
          %131 = dma.hbm_to_smem %s1, 128, [#allocation6], [#allocation4]
        $region16: #{tpu_custom_call.1} parent=11 // pred_fallthru
          _
        // Predicated region
        $region17: #{tpu_custom_call.1} parent=11 // pred_check
          %p132 = pneg %p82
        $region18: #{tpu_custom_call.1} parent=11 // pred_check_branch
          %134 = sbr.rel (%p132) target = $region20
        $region19: #{tpu_custom_call.1} parent=11 // pred_region
          %s136 = ssub.s32 64, 64
          %137 = vsyncadd [#allocation5], %s136
          %s139 = sshll.u32 %s2, 4
          %s140 = int_to_ptr.vmem [resolvable:$true] %s139
          %142 = dma.vmem_to_smem %s140, 64, [#allocation7], [#allocation5]
        $region20: #{tpu_custom_call.1} parent=11 // pred_fallthru
          _
      $region12: #{tpu_custom_call.1} parent=5 // pred_fallthru
        _
      %p143 = scmp.lt.s32.totalorder %s14, 2
      // Predicated region
      $region21: #{tpu_custom_call.1} parent=5 // pred_check
        %p144 = pneg %p143
      $region22: #{tpu_custom_call.1} parent=5 // pred_check_branch
        %146 = sbr.rel (%p144) target = $region24
      $region23: #{tpu_custom_call.1} parent=5 // pred_region
        // Predicated region
        $region25: #{tpu_custom_call.1} parent=23 // pred_check
          %p147 = pneg %p34
        $region26: #{tpu_custom_call.1} parent=23 // pred_check_branch
          %149 = sbr.rel (%p147) target = $region28
        $region27: #{tpu_custom_call.1} parent=23 // pred_region
          %s150 = sand.u32 %s24, 1
          %s151 = scalar_lea.sflag [#allocation3], %s150
          %s152 = sand.u32 %s24, 1
          %s153 = smul.addr %s152, 64
          %s154 = scalar_lea.vmem [#allocation2], %s153
          %s156 = ssub.s32 1024, 1024
          %157 = vsyncadd %s151, %s156
          %s158 = smul.addr %s14, 8
          %s159 = smul.addr %s158, 128
          %s160 = scalar_lea.hbm %s0, %s159
          %s161 = sshll.u32 %s154, 4
          %s162 = int_to_ptr.vmem [resolvable:$true] %s161
          %167 = dma.hbm_to_vmem [thread:$0]  %s160, 1024, %s162, %s151, 128, 128, 8
        $region28: #{tpu_custom_call.1} parent=23 // pred_fallthru
          _
      $region24: #{tpu_custom_call.1} parent=5 // pred_fallthru
        _
      %p168 = scmp.le.s32.totalorder 1, %s14
      %p169 = scmp.lt.s32.totalorder %s14, 3
      %p170 = pnand %p168, %p169
      %p171 = pneg %p170
      // Predicated region
      $region29: #{tpu_custom_call.1} parent=5 // pred_check
        _
      $region30: #{tpu_custom_call.1} parent=5 // pred_check_branch
        %173 = sbr.rel (%p170) target = $region32
      $region31: #{tpu_custom_call.1} parent=5 // pred_region
        %s174 = ssub.s32 %s14, 1
        %s175 = sand.u32 %s27, 1
        %s176 = scalar_lea.sflag [#allocation3], %s175
        %s177 = sand.u32 %s27, 1
        %s178 = smul.addr %s177, 64
        %s179 = scalar_lea.vmem [#allocation2], %s178
        // Predicated region
        $region33: #{tpu_custom_call.1} parent=31 // pred_check
          %p180 = pneg %p40
        $region34: #{tpu_custom_call.1} parent=31 // pred_check_branch
          %182 = sbr.rel (%p180) target = $region36
        $region35: #{tpu_custom_call.1} parent=31 // pred_region
          %183 = dma.done %s176, 1024
        $region36: #{tpu_custom_call.1} parent=31 // pred_fallthru
          _
        // Predicated region
        $region37: #{tpu_custom_call.1} parent=31 // pred_check
          %p184 = pneg %p61
        $region38: #{tpu_custom_call.1} parent=31 // pred_check_branch
          %186 = sbr.rel (%p184) target = $region40
        $region39: #{tpu_custom_call.1} parent=31 // pred_region
          %187 = dma.done [#allocation4], 128
        $region40: #{tpu_custom_call.1} parent=31 // pred_fallthru
          _
        // Predicated region
        $region41: #{tpu_custom_call.1} parent=31 // pred_check
          %p188 = pneg %p82
        $region42: #{tpu_custom_call.1} parent=31 // pred_check_branch
          %190 = sbr.rel (%p188) target = $region44
        $region43: #{tpu_custom_call.1} parent=31 // pred_region
          %191 = dma.done [#allocation5], 64
        $region44: #{tpu_custom_call.1} parent=31 // pred_fallthru
          _
        %192 = sfence
        %s193 = sand.u32 %s27, 1
        %s194 = scalar_lea.sflag [#allocation3], %s193
        %s195 = sand.u32 %s27, 1
        %s196 = smul.addr %s195, 64
        %s197 = scalar_lea.vmem [#allocation2], %s196
        %p198 = pneg %p40
        %p199 = pneg %p37
        %p200 = pneg %p61
        %p201 = pneg %p58
        %p202 = pneg %p82
        %p203 = pneg %p79
        %p204 = pneg %p108
        %p205 = pneg %p105
        %p206 = scmp.lt.s32.totalorder %s19, 1
        %s207 = scalar_select %p206, %s19, 1
        %s208 = smul.addr %s207, 8
        %s209 = smul.addr %s208, 8
        %s210 = scalar_lea.vmem %s3, %s209
        %p211 = scmp.lt.s32.totalorder %s19, 1
        %s212 = scalar_select %p211, %s19, 1
        %s213 = smul.addr %s212, 8
        %s214 = smul.addr %s213, 8
        %s215 = scalar_lea.vmem %s3, %s214
        %v216 = vld [vmem:[%s179] sm:$0xff]
        %v217 = vld [vmem:[%s179 + $0x8] sm:$0x3f]
        %s218 = sld [smem:[#allocation6]]
        %v219 = vstv %s218
        %v220 = vmul.f32 %v219, %v216
        %v221 = vmul.f32 %v219, %v217
        %v222 = vadd.f32 %v220, 0.0
        %v223 = vadd.f32 %v221, 0.0
        %s224 = sld [smem:[#allocation6 + $0x80]]
        %v225 = vstv %s224
        %v226 = vmul.f32 %v225, %v216
        %v227 = vmul.f32 %v225, %v217
        %v228 = vadd.f32 %v226, 0.0
        %v229 = vadd.f32 %v227, 0.0
        %s230 = sld [smem:[#allocation6 + $0x1]]
        %v231 = vstv %s230
        %v232 = vmul.f32 %v231, %v216
        %v233 = vmul.f32 %v231, %v217
        %236 = vrot.lane.b32.xlu0 %v232, 127
        %v237 = vpop.permute.xlu0 %236
        %238 = vrot.lane.b32.xlu0 %v233, 127
        %v239 = vpop.permute.xlu0 %238
        %v242 = vadd.f32 %v222, %v237
        %v243 = vadd.f32 %v223, %v239
        %s244 = sld [smem:[#allocation6 + $0x81]]
        %v245 = vstv %s244
        %v246 = vmul.f32 %v245, %v216
        %v247 = vmul.f32 %v245, %v217
        %250 = vrot.lane.b32.xlu0 %v246, 127
        %v251 = vpop.permute.xlu0 %250
        %252 = vrot.lane.b32.xlu0 %v247, 127
        %v253 = vpop.permute.xlu0 %252
        %v256 = vadd.f32 %v228, %v251
        %v257 = vadd.f32 %v229, %v253
        %s258 = sld [smem:[#allocation6 + $0x2]]
        %v259 = vstv %s258
        %v260 = vmul.f32 %v259, %v216
        %v261 = vmul.f32 %v259, %v217
        %264 = vrot.lane.b32.xlu0 %v260, 126
        %v265 = vpop.permute.xlu0 %264
        %266 = vrot.lane.b32.xlu0 %v261, 126
        %v267 = vpop.permute.xlu0 %266
        %v270 = vadd.f32 %v242, %v265
        %v271 = vadd.f32 %v243, %v267
        %s272 = sld [smem:[#allocation6 + $0x82]]
        %v273 = vstv %s272
        %v274 = vmul.f32 %v273, %v216
        %v275 = vmul.f32 %v273, %v217
        %278 = vrot.lane.b32.xlu0 %v274, 126
        %v279 = vpop.permute.xlu0 %278
        %280 = vrot.lane.b32.xlu0 %v275, 126
        %v281 = vpop.permute.xlu0 %280
        %v284 = vadd.f32 %v256, %v279
        %v285 = vadd.f32 %v257, %v281
        %v286 = vld [vmem:[%s179 + $0x1] sm:$0xff]
        %v287 = vld [vmem:[%s179 + $0x9] sm:$0x3f]
        %s288 = sld [smem:[#allocation6 + $0x3]]
        %v289 = vstv %s288
        %v290 = vmul.f32 %v289, %v286
        %v291 = vmul.f32 %v289, %v287
        %v292 = vadd.f32 %v270, %v290
        %v293 = vadd.f32 %v271, %v291
        %s294 = sld [smem:[#allocation6 + $0x83]]
        %v295 = vstv %s294
        %v296 = vmul.f32 %v295, %v286
        %v297 = vmul.f32 %v295, %v287
        %v298 = vadd.f32 %v284, %v296
        %v299 = vadd.f32 %v285, %v297
        %s300 = sld [smem:[#allocation6 + $0x4]]
        %v301 = vstv %s300
        %v302 = vmul.f32 %v301, %v286
        %v303 = vmul.f32 %v301, %v287
        %306 = vrot.lane.b32.xlu0 %v302, 127
        %v307 = vpop.permute.xlu0 %306
        %308 = vrot.lane.b32.xlu0 %v303, 127
        %v309 = vpop.permute.xlu0 %308
        %v312 = vadd.f32 %v292, %v307
        %v313 = vadd.f32 %v293, %v309
        %s314 = sld [smem:[#allocation6 + $0x84]]
        %v315 = vstv %s314
        %v316 = vmul.f32 %v315, %v286
        %v317 = vmul.f32 %v315, %v287
        %320 = vrot.lane.b32.xlu0 %v316, 127
        %v321 = vpop.permute.xlu0 %320
        %322 = vrot.lane.b32.xlu0 %v317, 127
        %v323 = vpop.permute.xlu0 %322
        %v326 = vadd.f32 %v298, %v321
        %v327 = vadd.f32 %v299, %v323
        %s328 = sld [smem:[#allocation6 + $0x5]]
        %v329 = vstv %s328
        %v330 = vmul.f32 %v329, %v286
        %v331 = vmul.f32 %v329, %v287
        %334 = vrot.lane.b32.xlu0 %v330, 126
        %v335 = vpop.permute.xlu0 %334
        %336 = vrot.lane.b32.xlu0 %v331, 126
        %v337 = vpop.permute.xlu0 %336
        %v340 = vadd.f32 %v312, %v335
        %v341 = vadd.f32 %v313, %v337
        %s342 = sld [smem:[#allocation6 + $0x85]]
        %v343 = vstv %s342
        %v344 = vmul.f32 %v343, %v286
        %v345 = vmul.f32 %v343, %v287
        %348 = vrot.lane.b32.xlu0 %v344, 126
        %v349 = vpop.permute.xlu0 %348
        %350 = vrot.lane.b32.xlu0 %v345, 126
        %v351 = vpop.permute.xlu0 %350
        %v354 = vadd.f32 %v326, %v349
        %v355 = vadd.f32 %v327, %v351
        %v356 = vld [vmem:[%s179 + $0x2] sm:$0xff]
        %v357 = vld [vmem:[%s179 + $0xa] sm:$0x3f]
        %s358 = sld [smem:[#allocation6 + $0x6]]
        %v359 = vstv %s358
        %v360 = vmul.f32 %v359, %v356
        %v361 = vmul.f32 %v359, %v357
        %v362 = vadd.f32 %v340, %v360
        %v363 = vadd.f32 %v341, %v361
        %s364 = sld [smem:[#allocation6 + $0x86]]
        %v365 = vstv %s364
        %v366 = vmul.f32 %v365, %v356
        %v367 = vmul.f32 %v365, %v357
        %v368 = vadd.f32 %v354, %v366
        %v369 = vadd.f32 %v355, %v367
        %s370 = sld [smem:[#allocation6 + $0x7]]
        %v371 = vstv %s370
        %v372 = vmul.f32 %v371, %v356
        %v373 = vmul.f32 %v371, %v357
        %376 = vrot.lane.b32.xlu0 %v372, 127
        %v377 = vpop.permute.xlu0 %376
        %378 = vrot.lane.b32.xlu0 %v373, 127
        %v379 = vpop.permute.xlu0 %378
        %v382 = vadd.f32 %v362, %v377
        %v383 = vadd.f32 %v363, %v379
        %s384 = sld [smem:[#allocation6 + $0x87]]
        %v385 = vstv %s384
        %v386 = vmul.f32 %v385, %v356
        %v387 = vmul.f32 %v385, %v357
        %390 = vrot.lane.b32.xlu0 %v386, 127
        %v391 = vpop.permute.xlu0 %390
        %392 = vrot.lane.b32.xlu0 %v387, 127
        %v393 = vpop.permute.xlu0 %392
        %v396 = vadd.f32 %v368, %v391
        %v397 = vadd.f32 %v369, %v393
        %s398 = sld [smem:[#allocation6 + $0x8]]
        %v399 = vstv %s398
        %v400 = vmul.f32 %v399, %v356
        %v401 = vmul.f32 %v399, %v357
        %404 = vrot.lane.b32.xlu0 %v400, 126
        %v405 = vpop.permute.xlu0 %404
        %406 = vrot.lane.b32.xlu0 %v401, 126
        %v407 = vpop.permute.xlu0 %406
        %v410 = vadd.f32 %v382, %v405
        %v411 = vadd.f32 %v383, %v407
        %s412 = sld [smem:[#allocation6 + $0x88]]
        %v413 = vstv %s412
        %v414 = vmul.f32 %v413, %v356
        %v415 = vmul.f32 %v413, %v357
        %418 = vrot.lane.b32.xlu0 %v414, 126
        %v419 = vpop.permute.xlu0 %418
        %420 = vrot.lane.b32.xlu0 %v415, 126
        %v421 = vpop.permute.xlu0 %420
        %v424 = vadd.f32 %v396, %v419
        %v425 = vadd.f32 %v397, %v421
        %s426 = sld [smem:[#allocation7]]
        %v427 = vstv %s426
        %v428 = vmul.f32 %v427, %v410
        %v429 = vmul.f32 %v427, %v411
        %v430 = vadd.f32 %v428, 0.0
        %v431 = vadd.f32 %v429, 0.0
        %s432 = sld [smem:[#allocation7 + $0x80]]
        %v433 = vstv %s432
        %v434 = vmul.f32 %v433, %v410
        %v435 = vmul.f32 %v433, %v411
        %v436 = vadd.f32 %v434, 0.0
        %v437 = vadd.f32 %v435, 0.0
        %s438 = sld [smem:[#allocation7 + $0x100]]
        %v439 = vstv %s438
        %v440 = vmul.f32 %v439, %v410
        %v441 = vmul.f32 %v439, %v411
        %v442 = vadd.f32 %v440, 0.0
        %v443 = vadd.f32 %v441, 0.0
        %s444 = sld [smem:[#allocation7 + $0x180]]
        %v445 = vstv %s444
        %v446 = vmul.f32 %v445, %v410
        %v447 = vmul.f32 %v445, %v411
        %v448 = vadd.f32 %v446, 0.0
        %v449 = vadd.f32 %v447, 0.0
        %s450 = sld [smem:[#allocation7 + $0x1]]
        %v451 = vstv %s450
        %v452 = vmul.f32 %v451, %v424
        %v453 = vmul.f32 %v451, %v425
        %v454 = vadd.f32 %v430, %v452
        %v455 = vadd.f32 %v431, %v453
        %s456 = sld [smem:[#allocation7 + $0x81]]
        %v457 = vstv %s456
        %v458 = vmul.f32 %v457, %v424
        %v459 = vmul.f32 %v457, %v425
        %v460 = vadd.f32 %v436, %v458
        %v461 = vadd.f32 %v437, %v459
        %s462 = sld [smem:[#allocation7 + $0x101]]
        %v463 = vstv %s462
        %v464 = vmul.f32 %v463, %v424
        %v465 = vmul.f32 %v463, %v425
        %v466 = vadd.f32 %v442, %v464
        %v467 = vadd.f32 %v443, %v465
        %s468 = sld [smem:[#allocation7 + $0x181]]
        %v469 = vstv %s468
        %v470 = vmul.f32 %v469, %v424
        %v471 = vmul.f32 %v469, %v425
        %v472 = vadd.f32 %v448, %v470
        %v473 = vadd.f32 %v449, %v471
        %s474 = scalar_lea.vmem %s179, 16 [#allocation2]
        %v475 = vld [vmem:[%s474] sm:$0xff]
        %v476 = vld [vmem:[%s474 + $0x8] sm:$0x3f]
        %s477 = sld [smem:[#allocation6 + $0x100]]
        %v478 = vstv %s477
        %v479 = vmul.f32 %v478, %v475
        %v480 = vmul.f32 %v478, %v476
        %v481 = vadd.f32 %v479, 0.0
        %v482 = vadd.f32 %v480, 0.0
        %s483 = sld [smem:[#allocation6 + $0x180]]
        %v484 = vstv %s483
        %v485 = vmul.f32 %v484, %v475
        %v486 = vmul.f32 %v484, %v476
        %v487 = vadd.f32 %v485, 0.0
        %v488 = vadd.f32 %v486, 0.0
        %s489 = sld [smem:[#allocation6 + $0x101]]
        %v490 = vstv %s489
        %v491 = vmul.f32 %v490, %v475
        %v492 = vmul.f32 %v490, %v476
        %495 = vrot.lane.b32.xlu0 %v491, 127
        %v496 = vpop.permute.xlu0 %495
        %497 = vrot.lane.b32.xlu0 %v492, 127
        %v498 = vpop.permute.xlu0 %497
        %v501 = vadd.f32 %v481, %v496
        %v502 = vadd.f32 %v482, %v498
        %s503 = sld [smem:[#allocation6 + $0x181]]
        %v504 = vstv %s503
        %v505 = vmul.f32 %v504, %v475
        %v506 = vmul.f32 %v504, %v476
        %509 = vrot.lane.b32.xlu0 %v505, 127
        %v510 = vpop.permute.xlu0 %509
        %511 = vrot.lane.b32.xlu0 %v506, 127
        %v512 = vpop.permute.xlu0 %511
        %v515 = vadd.f32 %v487, %v510
        %v516 = vadd.f32 %v488, %v512
        %s517 = sld [smem:[#allocation6 + $0x102]]
        %v518 = vstv %s517
        %v519 = vmul.f32 %v518, %v475
        %v520 = vmul.f32 %v518, %v476
        %523 = vrot.lane.b32.xlu0 %v519, 126
        %v524 = vpop.permute.xlu0 %523
        %525 = vrot.lane.b32.xlu0 %v520, 126
        %v526 = vpop.permute.xlu0 %525
        %v529 = vadd.f32 %v501, %v524
        %v530 = vadd.f32 %v502, %v526
        %s531 = sld [smem:[#allocation6 + $0x182]]
        %v532 = vstv %s531
        %v533 = vmul.f32 %v532, %v475
        %v534 = vmul.f32 %v532, %v476
        %537 = vrot.lane.b32.xlu0 %v533, 126
        %v538 = vpop.permute.xlu0 %537
        %539 = vrot.lane.b32.xlu0 %v534, 126
        %v540 = vpop.permute.xlu0 %539
        %v543 = vadd.f32 %v515, %v538
        %v544 = vadd.f32 %v516, %v540
        %v545 = vld [vmem:[%s474 + $0x1] sm:$0xff]
        %v546 = vld [vmem:[%s474 + $0x9] sm:$0x3f]
        %s547 = sld [smem:[#allocation6 + $0x103]]
        %v548 = vstv %s547
        %v549 = vmul.f32 %v548, %v545
        %v550 = vmul.f32 %v548, %v546
        %v551 = vadd.f32 %v529, %v549
        %v552 = vadd.f32 %v530, %v550
        %s553 = sld [smem:[#allocation6 + $0x183]]
        %v554 = vstv %s553
        %v555 = vmul.f32 %v554, %v545
        %v556 = vmul.f32 %v554, %v546
        %v557 = vadd.f32 %v543, %v555
        %v558 = vadd.f32 %v544, %v556
        %s559 = sld [smem:[#allocation6 + $0x104]]
        %v560 = vstv %s559
        %v561 = vmul.f32 %v560, %v545
        %v562 = vmul.f32 %v560, %v546
        %565 = vrot.lane.b32.xlu0 %v561, 127
        %v566 = vpop.permute.xlu0 %565
        %567 = vrot.lane.b32.xlu0 %v562, 127
        %v568 = vpop.permute.xlu0 %567
        %v571 = vadd.f32 %v551, %v566
        %v572 = vadd.f32 %v552, %v568
        %s573 = sld [smem:[#allocation6 + $0x184]]
        %v574 = vstv %s573
        %v575 = vmul.f32 %v574, %v545
        %v576 = vmul.f32 %v574, %v546
        %579 = vrot.lane.b32.xlu0 %v575, 127
        %v580 = vpop.permute.xlu0 %579
        %581 = vrot.lane.b32.xlu0 %v576, 127
        %v582 = vpop.permute.xlu0 %581
        %v585 = vadd.f32 %v557, %v580
        %v586 = vadd.f32 %v558, %v582
        %s587 = sld [smem:[#allocation6 + $0x105]]
        %v588 = vstv %s587
        %v589 = vmul.f32 %v588, %v545
        %v590 = vmul.f32 %v588, %v546
        %593 = vrot.lane.b32.xlu0 %v589, 126
        %v594 = vpop.permute.xlu0 %593
        %595 = vrot.lane.b32.xlu0 %v590, 126
        %v596 = vpop.permute.xlu0 %595
        %v599 = vadd.f32 %v571, %v594
        %v600 = vadd.f32 %v572, %v596
        %s601 = sld [smem:[#allocation6 + $0x185]]
        %v602 = vstv %s601
        %v603 = vmul.f32 %v602, %v545
        %v604 = vmul.f32 %v602, %v546
        %607 = vrot.lane.b32.xlu0 %v603, 126
        %v608 = vpop.permute.xlu0 %607
        %609 = vrot.lane.b32.xlu0 %v604, 126
        %v610 = vpop.permute.xlu0 %609
        %v613 = vadd.f32 %v585, %v608
        %v614 = vadd.f32 %v586, %v610
        %v615 = vld [vmem:[%s474 + $0x2] sm:$0xff]
        %v616 = vld [vmem:[%s474 + $0xa] sm:$0x3f]
        %s617 = sld [smem:[#allocation6 + $0x106]]
        %v618 = vstv %s617
        %v619 = vmul.f32 %v618, %v615
        %v620 = vmul.f32 %v618, %v616
        %v621 = vadd.f32 %v599, %v619
        %v622 = vadd.f32 %v600, %v620
        %s623 = sld [smem:[#allocation6 + $0x186]]
        %v624 = vstv %s623
        %v625 = vmul.f32 %v624, %v615
        %v626 = vmul.f32 %v624, %v616
        %v627 = vadd.f32 %v613, %v625
        %v628 = vadd.f32 %v614, %v626
        %s629 = sld [smem:[#allocation6 + $0x107]]
        %v630 = vstv %s629
        %v631 = vmul.f32 %v630, %v615
        %v632 = vmul.f32 %v630, %v616
        %635 = vrot.lane.b32.xlu0 %v631, 127
        %v636 = vpop.permute.xlu0 %635
        %637 = vrot.lane.b32.xlu0 %v632, 127
        %v638 = vpop.permute.xlu0 %637
        %v641 = vadd.f32 %v621, %v636
        %v642 = vadd.f32 %v622, %v638
        %s643 = sld [smem:[#allocation6 + $0x187]]
        %v644 = vstv %s643
        %v645 = vmul.f32 %v644, %v615
        %v646 = vmul.f32 %v644, %v616
        %649 = vrot.lane.b32.xlu0 %v645, 127
        %v650 = vpop.permute.xlu0 %649
        %651 = vrot.lane.b32.xlu0 %v646, 127
        %v652 = vpop.permute.xlu0 %651
        %v655 = vadd.f32 %v627, %v650
        %v656 = vadd.f32 %v628, %v652
        %s657 = sld [smem:[#allocation6 + $0x108]]
        %v658 = vstv %s657
        %v659 = vmul.f32 %v658, %v615
        %v660 = vmul.f32 %v658, %v616
        %663 = vrot.lane.b32.xlu0 %v659, 126
        %v664 = vpop.permute.xlu0 %663
        %665 = vrot.lane.b32.xlu0 %v660, 126
        %v666 = vpop.permute.xlu0 %665
        %v669 = vadd.f32 %v641, %v664
        %v670 = vadd.f32 %v642, %v666
        %s671 = sld [smem:[#allocation6 + $0x188]]
        %v672 = vstv %s671
        %v673 = vmul.f32 %v672, %v615
        %v674 = vmul.f32 %v672, %v616
        %677 = vrot.lane.b32.xlu0 %v673, 126
        %v678 = vpop.permute.xlu0 %677
        %679 = vrot.lane.b32.xlu0 %v674, 126
        %v680 = vpop.permute.xlu0 %679
        %v683 = vadd.f32 %v655, %v678
        %v684 = vadd.f32 %v656, %v680
        %s685 = sld [smem:[#allocation7 + $0x2]]
        %v686 = vstv %s685
        %v687 = vmul.f32 %v686, %v669
        %v688 = vmul.f32 %v686, %v670
        %v689 = vadd.f32 %v454, %v687
        %v690 = vadd.f32 %v455, %v688
        %s691 = sld [smem:[#allocation7 + $0x82]]
        %v692 = vstv %s691
        %v693 = vmul.f32 %v692, %v669
        %v694 = vmul.f32 %v692, %v670
        %v695 = vadd.f32 %v460, %v693
        %v696 = vadd.f32 %v461, %v694
        %s697 = sld [smem:[#allocation7 + $0x102]]
        %v698 = vstv %s697
        %v699 = vmul.f32 %v698, %v669
        %v700 = vmul.f32 %v698, %v670
        %v701 = vadd.f32 %v466, %v699
        %v702 = vadd.f32 %v467, %v700
        %s703 = sld [smem:[#allocation7 + $0x182]]
        %v704 = vstv %s703
        %v705 = vmul.f32 %v704, %v669
        %v706 = vmul.f32 %v704, %v670
        %v707 = vadd.f32 %v472, %v705
        %v708 = vadd.f32 %v473, %v706
        %s709 = sld [smem:[#allocation7 + $0x3]]
        %v710 = vstv %s709
        %v711 = vmul.f32 %v710, %v683
        %v712 = vmul.f32 %v710, %v684
        %v713 = vadd.f32 %v689, %v711
        %v714 = vadd.f32 %v690, %v712
        %s715 = sld [smem:[#allocation7 + $0x83]]
        %v716 = vstv %s715
        %v717 = vmul.f32 %v716, %v683
        %v718 = vmul.f32 %v716, %v684
        %v719 = vadd.f32 %v695, %v717
        %v720 = vadd.f32 %v696, %v718
        %s721 = sld [smem:[#allocation7 + $0x103]]
        %v722 = vstv %s721
        %v723 = vmul.f32 %v722, %v683
        %v724 = vmul.f32 %v722, %v684
        %v725 = vadd.f32 %v701, %v723
        %v726 = vadd.f32 %v702, %v724
        %s727 = sld [smem:[#allocation7 + $0x183]]
        %v728 = vstv %s727
        %v729 = vmul.f32 %v728, %v683
        %v730 = vmul.f32 %v728, %v684
        %v731 = vadd.f32 %v707, %v729
        %v732 = vadd.f32 %v708, %v730
        %s733 = scalar_lea.vmem %s179, 32 [#allocation2]
        %v734 = vld [vmem:[%s733] sm:$0xff]
        %v735 = vld [vmem:[%s733 + $0x8] sm:$0x3f]
        %s736 = sld [smem:[#allocation6 + $0x200]]
        %v737 = vstv %s736
        %v738 = vmul.f32 %v737, %v734
        %v739 = vmul.f32 %v737, %v735
        %v740 = vadd.f32 %v738, 0.0
        %v741 = vadd.f32 %v739, 0.0
        %s742 = sld [smem:[#allocation6 + $0x280]]
        %v743 = vstv %s742
        %v744 = vmul.f32 %v743, %v734
        %v745 = vmul.f32 %v743, %v735
        %v746 = vadd.f32 %v744, 0.0
        %v747 = vadd.f32 %v745, 0.0
        %s748 = sld [smem:[#allocation6 + $0x201]]
        %v749 = vstv %s748
        %v750 = vmul.f32 %v749, %v734
        %v751 = vmul.f32 %v749, %v735
        %754 = vrot.lane.b32.xlu0 %v750, 127
        %v755 = vpop.permute.xlu0 %754
        %756 = vrot.lane.b32.xlu0 %v751, 127
        %v757 = vpop.permute.xlu0 %756
        %v760 = vadd.f32 %v740, %v755
        %v761 = vadd.f32 %v741, %v757
        %s762 = sld [smem:[#allocation6 + $0x281]]
        %v763 = vstv %s762
        %v764 = vmul.f32 %v763, %v734
        %v765 = vmul.f32 %v763, %v735
        %768 = vrot.lane.b32.xlu0 %v764, 127
        %v769 = vpop.permute.xlu0 %768
        %770 = vrot.lane.b32.xlu0 %v765, 127
        %v771 = vpop.permute.xlu0 %770
        %v774 = vadd.f32 %v746, %v769
        %v775 = vadd.f32 %v747, %v771
        %s776 = sld [smem:[#allocation6 + $0x202]]
        %v777 = vstv %s776
        %v778 = vmul.f32 %v777, %v734
        %v779 = vmul.f32 %v777, %v735
        %782 = vrot.lane.b32.xlu0 %v778, 126
        %v783 = vpop.permute.xlu0 %782
        %784 = vrot.lane.b32.xlu0 %v779, 126
        %v785 = vpop.permute.xlu0 %784
        %v788 = vadd.f32 %v760, %v783
        %v789 = vadd.f32 %v761, %v785
        %s790 = sld [smem:[#allocation6 + $0x282]]
        %v791 = vstv %s790
        %v792 = vmul.f32 %v791, %v734
        %v793 = vmul.f32 %v791, %v735
        %796 = vrot.lane.b32.xlu0 %v792, 126
        %v797 = vpop.permute.xlu0 %796
        %798 = vrot.lane.b32.xlu0 %v793, 126
        %v799 = vpop.permute.xlu0 %798
        %v802 = vadd.f32 %v774, %v797
        %v803 = vadd.f32 %v775, %v799
        %v804 = vld [vmem:[%s733 + $0x1] sm:$0xff]
        %v805 = vld [vmem:[%s733 + $0x9] sm:$0x3f]
        %s806 = sld [smem:[#allocation6 + $0x203]]
        %v807 = vstv %s806
        %v808 = vmul.f32 %v807, %v804
        %v809 = vmul.f32 %v807, %v805
        %v810 = vadd.f32 %v788, %v808
        %v811 = vadd.f32 %v789, %v809
        %s812 = sld [smem:[#allocation6 + $0x283]]
        %v813 = vstv %s812
        %v814 = vmul.f32 %v813, %v804
        %v815 = vmul.f32 %v813, %v805
        %v816 = vadd.f32 %v802, %v814
        %v817 = vadd.f32 %v803, %v815
        %s818 = sld [smem:[#allocation6 + $0x204]]
        %v819 = vstv %s818
        %v820 = vmul.f32 %v819, %v804
        %v821 = vmul.f32 %v819, %v805
        %824 = vrot.lane.b32.xlu0 %v820, 127
        %v825 = vpop.permute.xlu0 %824
        %826 = vrot.lane.b32.xlu0 %v821, 127
        %v827 = vpop.permute.xlu0 %826
        %v830 = vadd.f32 %v810, %v825
        %v831 = vadd.f32 %v811, %v827
        %s832 = sld [smem:[#allocation6 + $0x284]]
        %v833 = vstv %s832
        %v834 = vmul.f32 %v833, %v804
        %v835 = vmul.f32 %v833, %v805
        %838 = vrot.lane.b32.xlu0 %v834, 127
        %v839 = vpop.permute.xlu0 %838
        %840 = vrot.lane.b32.xlu0 %v835, 127
        %v841 = vpop.permute.xlu0 %840
        %v844 = vadd.f32 %v816, %v839
        %v845 = vadd.f32 %v817, %v841
        %s846 = sld [smem:[#allocation6 + $0x205]]
        %v847 = vstv %s846
        %v848 = vmul.f32 %v847, %v804
        %v849 = vmul.f32 %v847, %v805
        %852 = vrot.lane.b32.xlu0 %v848, 126
        %v853 = vpop.permute.xlu0 %852
        %854 = vrot.lane.b32.xlu0 %v849, 126
        %v855 = vpop.permute.xlu0 %854
        %v858 = vadd.f32 %v830, %v853
        %v859 = vadd.f32 %v831, %v855
        %s860 = sld [smem:[#allocation6 + $0x285]]
        %v861 = vstv %s860
        %v862 = vmul.f32 %v861, %v804
        %v863 = vmul.f32 %v861, %v805
        %866 = vrot.lane.b32.xlu0 %v862, 126
        %v867 = vpop.permute.xlu0 %866
        %868 = vrot.lane.b32.xlu0 %v863, 126
        %v869 = vpop.permute.xlu0 %868
        %v872 = vadd.f32 %v844, %v867
        %v873 = vadd.f32 %v845, %v869
        %v874 = vld [vmem:[%s733 + $0x2] sm:$0xff]
        %v875 = vld [vmem:[%s733 + $0xa] sm:$0x3f]
        %s876 = sld [smem:[#allocation6 + $0x206]]
        %v877 = vstv %s876
        %v878 = vmul.f32 %v877, %v874
        %v879 = vmul.f32 %v877, %v875
        %v880 = vadd.f32 %v858, %v878
        %v881 = vadd.f32 %v859, %v879
        %s882 = sld [smem:[#allocation6 + $0x286]]
        %v883 = vstv %s882
        %v884 = vmul.f32 %v883, %v874
        %v885 = vmul.f32 %v883, %v875
        %v886 = vadd.f32 %v872, %v884
        %v887 = vadd.f32 %v873, %v885
        %s888 = sld [smem:[#allocation6 + $0x207]]
        %v889 = vstv %s888
        %v890 = vmul.f32 %v889, %v874
        %v891 = vmul.f32 %v889, %v875
        %894 = vrot.lane.b32.xlu0 %v890, 127
        %v895 = vpop.permute.xlu0 %894
        %896 = vrot.lane.b32.xlu0 %v891, 127
        %v897 = vpop.permute.xlu0 %896
        %v900 = vadd.f32 %v880, %v895
        %v901 = vadd.f32 %v881, %v897
        %s902 = sld [smem:[#allocation6 + $0x287]]
        %v903 = vstv %s902
        %v904 = vmul.f32 %v903, %v874
        %v905 = vmul.f32 %v903, %v875
        %908 = vrot.lane.b32.xlu0 %v904, 127
        %v909 = vpop.permute.xlu0 %908
        %910 = vrot.lane.b32.xlu0 %v905, 127
        %v911 = vpop.permute.xlu0 %910
        %v914 = vadd.f32 %v886, %v909
        %v915 = vadd.f32 %v887, %v911
        %s916 = sld [smem:[#allocation6 + $0x208]]
        %v917 = vstv %s916
        %v918 = vmul.f32 %v917, %v874
        %v919 = vmul.f32 %v917, %v875
        %922 = vrot.lane.b32.xlu0 %v918, 126
        %v923 = vpop.permute.xlu0 %922
        %924 = vrot.lane.b32.xlu0 %v919, 126
        %v925 = vpop.permute.xlu0 %924
        %v928 = vadd.f32 %v900, %v923
        %v929 = vadd.f32 %v901, %v925
        %s930 = sld [smem:[#allocation6 + $0x288]]
        %v931 = vstv %s930
        %v932 = vmul.f32 %v931, %v874
        %v933 = vmul.f32 %v931, %v875
        %936 = vrot.lane.b32.xlu0 %v932, 126
        %v937 = vpop.permute.xlu0 %936
        %938 = vrot.lane.b32.xlu0 %v933, 126
        %v939 = vpop.permute.xlu0 %938
        %v942 = vadd.f32 %v914, %v937
        %v943 = vadd.f32 %v915, %v939
        %s944 = sld [smem:[#allocation7 + $0x4]]
        %v945 = vstv %s944
        %v946 = vmul.f32 %v945, %v928
        %v947 = vmul.f32 %v945, %v929
        %v948 = vadd.f32 %v713, %v946
        %v949 = vadd.f32 %v714, %v947
        %s950 = sld [smem:[#allocation7 + $0x84]]
        %v951 = vstv %s950
        %v952 = vmul.f32 %v951, %v928
        %v953 = vmul.f32 %v951, %v929
        %v954 = vadd.f32 %v719, %v952
        %v955 = vadd.f32 %v720, %v953
        %s956 = sld [smem:[#allocation7 + $0x104]]
        %v957 = vstv %s956
        %v958 = vmul.f32 %v957, %v928
        %v959 = vmul.f32 %v957, %v929
        %v960 = vadd.f32 %v725, %v958
        %v961 = vadd.f32 %v726, %v959
        %s962 = sld [smem:[#allocation7 + $0x184]]
        %v963 = vstv %s962
        %v964 = vmul.f32 %v963, %v928
        %v965 = vmul.f32 %v963, %v929
        %v966 = vadd.f32 %v731, %v964
        %v967 = vadd.f32 %v732, %v965
        %s968 = sld [smem:[#allocation7 + $0x5]]
        %v969 = vstv %s968
        %v970 = vmul.f32 %v969, %v942
        %v971 = vmul.f32 %v969, %v943
        %v972 = vadd.f32 %v948, %v970
        %v973 = vadd.f32 %v949, %v971
        %s974 = sld [smem:[#allocation7 + $0x85]]
        %v975 = vstv %s974
        %v976 = vmul.f32 %v975, %v942
        %v977 = vmul.f32 %v975, %v943
        %v978 = vadd.f32 %v954, %v976
        %v979 = vadd.f32 %v955, %v977
        %s980 = sld [smem:[#allocation7 + $0x105]]
        %v981 = vstv %s980
        %v982 = vmul.f32 %v981, %v942
        %v983 = vmul.f32 %v981, %v943
        %v984 = vadd.f32 %v960, %v982
        %v985 = vadd.f32 %v961, %v983
        %s986 = sld [smem:[#allocation7 + $0x185]]
        %v987 = vstv %s986
        %v988 = vmul.f32 %v987, %v942
        %v989 = vmul.f32 %v987, %v943
        %v990 = vadd.f32 %v966, %v988
        %v991 = vadd.f32 %v967, %v989
        %s992 = scalar_lea.vmem %s179, 48 [#allocation2]
        %v993 = vld [vmem:[%s992] sm:$0xff]
        %v994 = vld [vmem:[%s992 + $0x8] sm:$0x3f]
        %s995 = sld [smem:[#allocation6 + $0x300]]
        %v996 = vstv %s995
        %v997 = vmul.f32 %v996, %v993
        %v998 = vmul.f32 %v996, %v994
        %v999 = vadd.f32 %v997, 0.0
        %v1000 = vadd.f32 %v998, 0.0
        %s1001 = sld [smem:[#allocation6 + $0x380]]
        %v1002 = vstv %s1001
        %v1003 = vmul.f32 %v1002, %v993
        %v1004 = vmul.f32 %v1002, %v994
        %v1005 = vadd.f32 %v1003, 0.0
        %v1006 = vadd.f32 %v1004, 0.0
        %s1007 = sld [smem:[#allocation6 + $0x301]]
        %v1008 = vstv %s1007
        %v1009 = vmul.f32 %v1008, %v993
        %v1010 = vmul.f32 %v1008, %v994
        %1013 = vrot.lane.b32.xlu0 %v1009, 127
        %v1014 = vpop.permute.xlu0 %1013
        %1015 = vrot.lane.b32.xlu0 %v1010, 127
        %v1016 = vpop.permute.xlu0 %1015
        %v1019 = vadd.f32 %v999, %v1014
        %v1020 = vadd.f32 %v1000, %v1016
        %s1021 = sld [smem:[#allocation6 + $0x381]]
        %v1022 = vstv %s1021
        %v1023 = vmul.f32 %v1022, %v993
        %v1024 = vmul.f32 %v1022, %v994
        %1027 = vrot.lane.b32.xlu0 %v1023, 127
        %v1028 = vpop.permute.xlu0 %1027
        %1029 = vrot.lane.b32.xlu0 %v1024, 127
        %v1030 = vpop.permute.xlu0 %1029
        %v1033 = vadd.f32 %v1005, %v1028
        %v1034 = vadd.f32 %v1006, %v1030
        %s1035 = sld [smem:[#allocation6 + $0x302]]
        %v1036 = vstv %s1035
        %v1037 = vmul.f32 %v1036, %v993
        %v1038 = vmul.f32 %v1036, %v994
        %1041 = vrot.lane.b32.xlu0 %v1037, 126
        %v1042 = vpop.permute.xlu0 %1041
        %1043 = vrot.lane.b32.xlu0 %v1038, 126
        %v1044 = vpop.permute.xlu0 %1043
        %v1047 = vadd.f32 %v1019, %v1042
        %v1048 = vadd.f32 %v1020, %v1044
        %s1049 = sld [smem:[#allocation6 + $0x382]]
        %v1050 = vstv %s1049
        %v1051 = vmul.f32 %v1050, %v993
        %v1052 = vmul.f32 %v1050, %v994
        %1055 = vrot.lane.b32.xlu0 %v1051, 126
        %v1056 = vpop.permute.xlu0 %1055
        %1057 = vrot.lane.b32.xlu0 %v1052, 126
        %v1058 = vpop.permute.xlu0 %1057
        %v1061 = vadd.f32 %v1033, %v1056
        %v1062 = vadd.f32 %v1034, %v1058
        %v1063 = vld [vmem:[%s992 + $0x1] sm:$0xff]
        %v1064 = vld [vmem:[%s992 + $0x9] sm:$0x3f]
        %s1065 = sld [smem:[#allocation6 + $0x303]]
        %v1066 = vstv %s1065
        %v1067 = vmul.f32 %v1066, %v1063
        %v1068 = vmul.f32 %v1066, %v1064
        %v1069 = vadd.f32 %v1047, %v1067
        %v1070 = vadd.f32 %v1048, %v1068
        %s1071 = sld [smem:[#allocation6 + $0x383]]
        %v1072 = vstv %s1071
        %v1073 = vmul.f32 %v1072, %v1063
        %v1074 = vmul.f32 %v1072, %v1064
        %v1075 = vadd.f32 %v1061, %v1073
        %v1076 = vadd.f32 %v1062, %v1074
        %s1077 = sld [smem:[#allocation6 + $0x304]]
        %v1078 = vstv %s1077
        %v1079 = vmul.f32 %v1078, %v1063
        %v1080 = vmul.f32 %v1078, %v1064
        %1083 = vrot.lane.b32.xlu0 %v1079, 127
        %v1084 = vpop.permute.xlu0 %1083
        %1085 = vrot.lane.b32.xlu0 %v1080, 127
        %v1086 = vpop.permute.xlu0 %1085
        %v1089 = vadd.f32 %v1069, %v1084
        %v1090 = vadd.f32 %v1070, %v1086
        %s1091 = sld [smem:[#allocation6 + $0x384]]
        %v1092 = vstv %s1091
        %v1093 = vmul.f32 %v1092, %v1063
        %v1094 = vmul.f32 %v1092, %v1064
        %1097 = vrot.lane.b32.xlu0 %v1093, 127
        %v1098 = vpop.permute.xlu0 %1097
        %1099 = vrot.lane.b32.xlu0 %v1094, 127
        %v1100 = vpop.permute.xlu0 %1099
        %v1103 = vadd.f32 %v1075, %v1098
        %v1104 = vadd.f32 %v1076, %v1100
        %s1105 = sld [smem:[#allocation6 + $0x305]]
        %v1106 = vstv %s1105
        %v1107 = vmul.f32 %v1106, %v1063
        %v1108 = vmul.f32 %v1106, %v1064
        %1111 = vrot.lane.b32.xlu0 %v1107, 126
        %v1112 = vpop.permute.xlu0 %1111
        %1113 = vrot.lane.b32.xlu0 %v1108, 126
        %v1114 = vpop.permute.xlu0 %1113
        %v1117 = vadd.f32 %v1089, %v1112
        %v1118 = vadd.f32 %v1090, %v1114
        %s1119 = sld [smem:[#allocation6 + $0x385]]
        %v1120 = vstv %s1119
        %v1121 = vmul.f32 %v1120, %v1063
        %v1122 = vmul.f32 %v1120, %v1064
        %1125 = vrot.lane.b32.xlu0 %v1121, 126
        %v1126 = vpop.permute.xlu0 %1125
        %1127 = vrot.lane.b32.xlu0 %v1122, 126
        %v1128 = vpop.permute.xlu0 %1127
        %v1131 = vadd.f32 %v1103, %v1126
        %v1132 = vadd.f32 %v1104, %v1128
        %v1133 = vld [vmem:[%s992 + $0x2] sm:$0xff]
        %v1134 = vld [vmem:[%s992 + $0xa] sm:$0x3f]
        %s1135 = sld [smem:[#allocation6 + $0x306]]
        %v1136 = vstv %s1135
        %v1137 = vmul.f32 %v1136, %v1133
        %v1138 = vmul.f32 %v1136, %v1134
        %v1139 = vadd.f32 %v1117, %v1137
        %v1140 = vadd.f32 %v1118, %v1138
        %s1141 = sld [smem:[#allocation6 + $0x386]]
        %v1142 = vstv %s1141
        %v1143 = vmul.f32 %v1142, %v1133
        %v1144 = vmul.f32 %v1142, %v1134
        %v1145 = vadd.f32 %v1131, %v1143
        %v1146 = vadd.f32 %v1132, %v1144
        %s1147 = sld [smem:[#allocation6 + $0x307]]
        %v1148 = vstv %s1147
        %v1149 = vmul.f32 %v1148, %v1133
        %v1150 = vmul.f32 %v1148, %v1134
        %1153 = vrot.lane.b32.xlu0 %v1149, 127
        %v1154 = vpop.permute.xlu0 %1153
        %1155 = vrot.lane.b32.xlu0 %v1150, 127
        %v1156 = vpop.permute.xlu0 %1155
        %v1159 = vadd.f32 %v1139, %v1154
        %v1160 = vadd.f32 %v1140, %v1156
        %s1161 = sld [smem:[#allocation6 + $0x387]]
        %v1162 = vstv %s1161
        %v1163 = vmul.f32 %v1162, %v1133
        %v1164 = vmul.f32 %v1162, %v1134
        %1167 = vrot.lane.b32.xlu0 %v1163, 127
        %v1168 = vpop.permute.xlu0 %1167
        %1169 = vrot.lane.b32.xlu0 %v1164, 127
        %v1170 = vpop.permute.xlu0 %1169
        %v1173 = vadd.f32 %v1145, %v1168
        %v1174 = vadd.f32 %v1146, %v1170
        %s1175 = sld [smem:[#allocation6 + $0x308]]
        %v1176 = vstv %s1175
        %v1177 = vmul.f32 %v1176, %v1133
        %v1178 = vmul.f32 %v1176, %v1134
        %1181 = vrot.lane.b32.xlu0 %v1177, 126
        %v1182 = vpop.permute.xlu0 %1181
        %1183 = vrot.lane.b32.xlu0 %v1178, 126
        %v1184 = vpop.permute.xlu0 %1183
        %v1187 = vadd.f32 %v1159, %v1182
        %v1188 = vadd.f32 %v1160, %v1184
        %s1189 = sld [smem:[#allocation6 + $0x388]]
        %v1190 = vstv %s1189
        %v1191 = vmul.f32 %v1190, %v1133
        %v1192 = vmul.f32 %v1190, %v1134
        %1195 = vrot.lane.b32.xlu0 %v1191, 126
        %v1196 = vpop.permute.xlu0 %1195
        %1197 = vrot.lane.b32.xlu0 %v1192, 126
        %v1198 = vpop.permute.xlu0 %1197
        %v1201 = vadd.f32 %v1173, %v1196
        %v1202 = vadd.f32 %v1174, %v1198
        %s1203 = sld [smem:[#allocation7 + $0x6]]
        %v1204 = vstv %s1203
        %v1205 = vmul.f32 %v1204, %v1187
        %v1206 = vmul.f32 %v1204, %v1188
        %v1207 = vadd.f32 %v972, %v1205
        %v1208 = vadd.f32 %v973, %v1206
        %s1209 = sld [smem:[#allocation7 + $0x86]]
        %v1210 = vstv %s1209
        %v1211 = vmul.f32 %v1210, %v1187
        %v1212 = vmul.f32 %v1210, %v1188
        %v1213 = vadd.f32 %v978, %v1211
        %v1214 = vadd.f32 %v979, %v1212
        %s1215 = sld [smem:[#allocation7 + $0x106]]
        %v1216 = vstv %s1215
        %v1217 = vmul.f32 %v1216, %v1187
        %v1218 = vmul.f32 %v1216, %v1188
        %v1219 = vadd.f32 %v984, %v1217
        %v1220 = vadd.f32 %v985, %v1218
        %s1221 = sld [smem:[#allocation7 + $0x186]]
        %v1222 = vstv %s1221
        %v1223 = vmul.f32 %v1222, %v1187
        %v1224 = vmul.f32 %v1222, %v1188
        %v1225 = vadd.f32 %v990, %v1223
        %v1226 = vadd.f32 %v991, %v1224
        %s1227 = sld [smem:[#allocation7 + $0x7]]
        %v1228 = vstv %s1227
        %v1229 = vmul.f32 %v1228, %v1201
        %v1230 = vmul.f32 %v1228, %v1202
        %v1231 = vadd.f32 %v1207, %v1229
        %v1232 = vadd.f32 %v1208, %v1230
        %s1233 = sld [smem:[#allocation7 + $0x87]]
        %v1234 = vstv %s1233
        %v1235 = vmul.f32 %v1234, %v1201
        %v1236 = vmul.f32 %v1234, %v1202
        %v1237 = vadd.f32 %v1213, %v1235
        %v1238 = vadd.f32 %v1214, %v1236
        %s1239 = sld [smem:[#allocation7 + $0x107]]
        %v1240 = vstv %s1239
        %v1241 = vmul.f32 %v1240, %v1201
        %v1242 = vmul.f32 %v1240, %v1202
        %v1243 = vadd.f32 %v1219, %v1241
        %v1244 = vadd.f32 %v1220, %v1242
        %s1245 = sld [smem:[#allocation7 + $0x187]]
        %v1246 = vstv %s1245
        %v1247 = vmul.f32 %v1246, %v1201
        %v1248 = vmul.f32 %v1246, %v1202
        %v1249 = vadd.f32 %v1225, %v1247
        %v1250 = vadd.f32 %v1226, %v1248
        %vm1251 = vcmask 113664
        %1252 = vst.msk [vmem:[%s215] sm:$0xff] %vm1251, %v1231
        %vm1253 = vcmask 111616
        %1254 = vst.msk [vmem:[%s215 + $0x8] sm:$0x3f] %vm1253, %v1232
        %s1255 = scalar_lea.vmem %s215, 16
        %1256 = vst.msk [vmem:[%s1255] sm:$0xff] %vm1251, %v1237
        %1257 = vst.msk [vmem:[%s1255 + $0x8] sm:$0x3f] %vm1253, %v1238
        %s1258 = scalar_lea.vmem %s215, 32
        %1259 = vst.msk [vmem:[%s1258] sm:$0xff] %vm1251, %v1243
        %1260 = vst.msk [vmem:[%s1258 + $0x8] sm:$0x3f] %vm1253, %v1244
        %s1261 = scalar_lea.vmem %s215, 48
        %1262 = vst.msk [vmem:[%s1261] sm:$0xff] %vm1251, %v1249
        %1263 = vst.msk [vmem:[%s1261 + $0x8] sm:$0x3f] %vm1253, %v1250
        %p1264 = scmp.lt.s32.totalorder %s19, 1
        %s1265 = scalar_select %p1264, %s19, 1
        %s1266 = smul.addr %s1265, 8
        %s1267 = smul.addr %s1266, 8
        %s1268 = scalar_lea.vmem %s3, %s1267
        // Predicated region
        $region45: #{tpu_custom_call.1} parent=31 // pred_check
          %p1269 = pneg %p105
        $region46: #{tpu_custom_call.1} parent=31 // pred_check_branch
          %1271 = sbr.rel (%p1269) target = $region48
        $region47: #{tpu_custom_call.1} parent=31 // pred_region
          _
        $region48: #{tpu_custom_call.1} parent=31 // pred_fallthru
          _
      $region32: #{tpu_custom_call.1} parent=5 // pred_fallthru
        _
      %p1272 = scmp.le.s32.totalorder 2, %s14
      // Predicated region
      $region49: #{tpu_custom_call.1} parent=5 // pred_check
        %p1273 = pneg %p1272
      $region50: #{tpu_custom_call.1} parent=5 // pred_check_branch
        %1275 = sbr.rel (%p1273) target = $region52
      $region51: #{tpu_custom_call.1} parent=5 // pred_region
        %s1276 = ssub.s32 %s14, 2
        // Predicated region
        $region53: #{tpu_custom_call.1} parent=51 // pred_check
          %p1277 = pneg %p111
        $region54: #{tpu_custom_call.1} parent=51 // pred_check_branch
          %1279 = sbr.rel (%p1277) target = $region56
        $region55: #{tpu_custom_call.1} parent=51 // pred_region
          %p1280 = scmp.lt.s32.totalorder %s20, 1
          %s1281 = scalar_select %p1280, %s20, 1
          %s1282 = smul.addr %s1281, 8
          %s1283 = smul.addr %s1282, 8
          %s1284 = scalar_lea.vmem %s3, %s1283
        $region56: #{tpu_custom_call.1} parent=51 // pred_fallthru
          _
      $region52: #{tpu_custom_call.1} parent=5 // pred_fallthru
        _
    $region6: #{tpu_custom_call.1} parent=1 // loop_footer
      %s18 = sadd.s32 1, %s14
    $region7: #{tpu_custom_call.1} parent=1 // loop_footer_branch
      %13 = sbr.rel target = $region3
    $region8: #{tpu_custom_call.1} parent=1 // loop_exit
      _
    %1285 = vsyncpa [#allocation3], 1
    %s1286 = scalar_lea.sflag [#allocation3], 1
    %1287 = vsyncpa %s1286, 1
    %1288 = vsyncpa [#allocation4], 1
    %s1289 = scalar_lea.sflag [#allocation4], 1
    %1290 = vsyncpa %s1289, 1
    %1291 = vsyncpa [#allocation5], 1
    %s1292 = scalar_lea.sflag [#allocation5], 1
    %1293 = vsyncpa %s1292, 1

</llo_original>
